<compile_context>
chip_gen: v7x
topology: tpu7x:2x2x1
jax: 0.10.0
libtpu: 0.0.40
codegen_flags: <defaults>
</compile_context>

<pallas_src>
import numpy as np
import jax
import jax.numpy as jnp
from jax.experimental import pallas as pl
from jax.experimental.pallas import tpu as pltpu

# ----------------------------- hyper-parameters ------------------------------
BATCH = 2
SEQ_LEN = 16          # seqlen
ENC_IN = 8            # film_enc_in (== emb_dim so fc(d_model, out_dim) typechecks)
D_MODEL = ENC_IN
OUT_DIM = 10          # backbone_out_dim
MODES1 = 4            # film_modes1
COMPRESSION = 16      # configs.version (hard-coded 16 in FiLM wrapper)
N_ORDER = 256         # window_size=[256] hard-coded in FiLMModel
MULTISCALE = (1, 2, 4)
NS = len(MULTISCALE)
MODES2 = min(MODES1, SEQ_LEN // 2)

BE = BATCH * ENC_IN            # rows processed together (b-major, e-minor)
KDIM = 2 * MODES2 * N_ORDER    # 2048: packed [Re | Im] spectral width
OUT_PAD = 128                  # lane-dense decode output
B_PAD = 8                      # sublane-aligned decode output rows


def _idft_sample_lambda():
    """irfft(out_ft, n=T)[T-1] == sum_m Re(out_ft[m] * lam[m]) when out_ft[m]=0 for m>=MODES2."""
    t0 = SEQ_LEN - 1
    lam = np.zeros(MODES2, dtype=np.complex128)
    for m in range(MODES2):
        theta = 2.0 * np.pi * m * t0 / SEQ_LEN
        if m == 0 or (SEQ_LEN % 2 == 0 and m == SEQ_LEN // 2):
            f = 1.0 / SEQ_LEN
        else:
            f = 2.0 / SEQ_LEN
        lam[m] = f * np.cos(theta) + 1j * f * np.sin(theta)
    return lam


# ------------------------- HiPPO-LegT parameter setup ------------------------
def _hippo_legt_matrices(N, dt):
    """transition('lmu', N) + scipy cont2discrete(bilinear) + eval_legendre, in numpy."""
    Q = np.arange(N, dtype=np.float64)
    R = (2 * Q + 1)[:, None]
    j, i = np.meshgrid(Q, Q)
    A = np.where(i < j, -1.0, (-1.0) ** (i - j + 1)) * R
    Bm = (-1.0) ** Q[:, None] * R                       # (N, 1)
    # bilinear (Tustin) discretization, alpha = 0.5
    I = np.eye(N)
    ema = I - 0.5 * dt * A
    Ad = np.linalg.solve(ema, I + 0.5 * dt * A)
    Bd = np.linalg.solve(ema, dt * Bm).squeeze(-1)      # (N,)
    # eval_matrix = eval_legendre(arange(N)[:,None], 1 - 2*vals).T  -> (len(vals), N)
    vals = np.arange(0.0, 1.0, dt)
    xg = 1.0 - 2.0 * vals
    Em = np.zeros((len(vals), N))
    Em[:, 0] = 1.0
    if N > 1:
        Em[:, 1] = xg
    for n in range(1, N - 1):
        Em[:, n + 1] = ((2 * n + 1) * xg * Em[:, n] - n * Em[:, n - 1]) / (n + 1)
    return Ad.astype(np.float32), Bd.astype(np.float32), Em.astype(np.float32)


def init_params(key):
    keys = jax.random.split(key, 5)
    scale = 1.0 / (N_ORDER * N_ORDER)
    AdT_l, Bd_l, Em_l, w0_l, w1_l, w2_l = [], [], [], [], [], []
    for s, ms in enumerate(MULTISCALE):
        dt = 1.0 / SEQ_LEN / ms
        Ad, Bd, Em = _hippo_legt_matrices(N_ORDER, dt)
        AdT_l.append(jnp.asarray(Ad.T))
        Bd_l.append(jnp.asarray(Bd))
        Em_l.append(jnp.asarray(Em))
        ks = jax.random.split(jax.random.fold_in(keys[0], s), 6)
        w0 = scale * (jax.random.uniform(ks[0], (N_ORDER, COMPRESSION))
                      + 1j * jax.random.uniform(ks[1], (N_ORDER, COMPRESSION)))
        w1 = scale * (jax.random.uniform(ks[2], (COMPRESSION, COMPRESSION, MODES2))
                      + 1j * jax.random.uniform(ks[3], (COMPRESSION, COMPRESSION, MODES2)))
        w2 = scale * (jax.random.uniform(ks[4], (COMPRESSION, N_ORDER))
                      + 1j * jax.random.uniform(ks[5], (COMPRESSION, N_ORDER)))
        w0_l.append(w0.astype(jnp.complex64))
        w1_l.append(w1.astype(jnp.complex64))
        w2_l.append(w2.astype(jnp.complex64))
    lim = 1.0 / np.sqrt(NS)
    mlp_w = jax.random.uniform(keys[1], (NS,), minval=-lim, maxval=lim)
    mlp_b = jax.random.uniform(keys[2], (1,), minval=-lim, maxval=lim)
    lim = 1.0 / np.sqrt(D_MODEL)
    fc_w = jax.random.uniform(keys[3], (OUT_DIM, D_MODEL), minval=-lim, maxval=lim)
    fc_b = jax.random.uniform(keys[4], (OUT_DIM,), minval=-lim, maxval=lim)
    return dict(AdT=AdT_l, Bd=Bd_l, Em=Em_l, w0=w0_l, w1=w1_l, w2=w2_l,
                mlp_w=mlp_w.astype(jnp.float32), mlp_b=mlp_b.astype(jnp.float32),
                fc_wT=jnp.asarray(fc_w).T.astype(jnp.float32),
                fc_b=jnp.asarray(fc_b).astype(jnp.float32))


# ------------------------- host-side folding for Pallas ----------------------
def pack_for_pallas(p):
    """Fold the whole per-scale linear path into two real matrices per scale:
         K_s (T, 2*MODES2*N): HiPPO recurrence + truncated rfft of the states c_t,
         W_s (2*MODES2*N, T): w0, (w1 * irfft-sample lambda), w2 and eval_matrix^T,
       so the kernel computes  x_dec_s = (xT @ K_s) @ W_s  with two MXU matmuls.
       Also pre-pad/tile the fc weights and bias for a lane-dense (8, 128) decode."""
    lam = _idft_sample_lambda()
    tgrid = np.arange(SEQ_LEN)
    mgrid = np.arange(MODES2)
    tw = np.exp(-2j * np.pi * np.outer(mgrid, tgrid) / SEQ_LEN)    # rfft twiddles (MODES2, T)

    K_l, W_l = [], []
    for s in range(NS):
        AdT = np.asarray(p['AdT'][s], dtype=np.float64)             # (N, N)
        Bd = np.asarray(p['Bd'][s], dtype=np.float64)               # (N,)
        Em = np.asarray(p['Em'][s], dtype=np.float64)               # (ms*T, N)

        # P[k] = B_d @ (A_d^T)^k  (row vector)  =>  c_t = sum_{tau<=t} f_tau * P[t-tau]
        P = np.zeros((SEQ_LEN, N_ORDER), np.float64)
        P[0] = Bd
        for k in range(1, SEQ_LEN):
            P[k] = P[k - 1] @ AdT
        # Kc[tau, m, :] = sum_{t>=tau} tw[m,t] * P[t-tau]  =>  a_m = sum_tau f_tau * Kc[tau, m]
        Kc = np.zeros((SEQ_LEN, MODES2, N_ORDER), np.complex128)
        for tau in range(SEQ_LEN):
            for t in range(tau, SEQ_LEN):
                Kc[tau] += tw[:, t][:, None] * P[t - tau][None, :]
        K = np.concatenate([Kc.real.reshape(SEQ_LEN, MODES2 * N_ORDER),
                            Kc.imag.reshape(SEQ_LEN, MODES2 * N_ORDER)], axis=1)  # (T, KDIM)

        # M_m = w0 @ (w1[:,:,m]*lam_m) @ w2 @ Em[-T:,:]^T (complex N x L);
        # x_dec = sum_m Re(a_m @ M_m) = [Re(a) | Im(a)] @ [Re(M); -Im(M)]
        w0 = np.asarray(p['w0'][s]).astype(np.complex128)
        w1 = np.asarray(p['w1'][s]).astype(np.complex128)
        w2 = np.asarray(p['w2'][s]).astype(np.complex128)
        w2E = w2 @ Em[-SEQ_LEN:, :].T                                # (C, L)
        Mm = np.zeros((MODES2, N_ORDER, SEQ_LEN), np.complex128)
        for m in range(MODES2):
            Mm[m] = (w0 @ (w1[:, :, m] * lam[m])) @ w2E
        W = np.concatenate([Mm.real.reshape(MODES2 * N_ORDER, SEQ_LEN),
                            -Mm.imag.reshape(MODES2 * N_ORDER, SEQ_LEN)], axis=0)  # (KDIM, L)

        K_l.append(K.astype(np.float32))
        W_l.append(W.astype(np.float32))

    gsel = np.zeros((B_PAD, BE), np.float32)                         # row-group selector
    for b in range(BATCH):
        gsel[b, b * ENC_IN:(b + 1) * ENC_IN] = 1.0
    fcw_rep = np.zeros((BE, OUT_PAD), np.float32)
    fcw_rep[:, :OUT_DIM] = np.tile(np.asarray(p['fc_wT']), (BATCH, 1))
    fcb_pad = np.zeros((1, OUT_PAD), np.float32)
    fcb_pad[0, :OUT_DIM] = np.asarray(p['fc_b'])

    return dict(K=jnp.asarray(np.stack(K_l, 0)),                     # (NS, T, KDIM)
                W=jnp.asarray(np.stack(W_l, 0)),                     # (NS, KDIM, T)
                mlp_w=p['mlp_w'], mlp_b=p['mlp_b'],
                gsel=jnp.asarray(gsel), fcw_rep=jnp.asarray(fcw_rep),
                fcb_pad=jnp.asarray(fcb_pad))


# ------------------------------- Pallas kernel ---------------------------------
# grid=(NS,), "arbitrary": per scale two MXU matmuls produce x_dec_s; the mlp combine is
# accumulated in a resident VMEM scratch and the mean + fc decode runs as a pl.when
# epilogue on the last scale with a lane-dense (8, 128) padded output.
def _film_fused_kernel(xT_ref, k_ref, w_ref, mlpw_ref, mlpb_ref,
                       fcwrep_ref, gsel_ref, fcb_ref,
                       xdec_ref, out_ref, comb_acc):
    s = pl.program_id(0)

    # Truncated-rfft coefficients of the HiPPO states, all modes at once (Re|Im packed):
    #   (BE, T) @ (T, 2*MODES2*N)
    a = jnp.dot(xT_ref[...], k_ref[0], preferred_element_type=jnp.float32)
    # Compressed SpectralConv1d + irfft(t=T-1) sample + eval_matrix projection (all folded):
    #   (BE, 2*MODES2*N) @ (2*MODES2*N, T)
    xdec = jnp.dot(a, w_ref[0], preferred_element_type=jnp.float32)
    xdec_ref[0] = xdec

    # --- fused decode epilogue ---
    @pl.when(s == 0)
    def _():
        comb_acc[...] = jnp.zeros_like(comb_acc)

    comb_acc[...] += mlpw_ref[s] * xdec

    @pl.when(s == NS - 1)
    def _():
        comb = comb_acc[...] + mlpb_ref[0]                           # mlp(NS->1)
        feat = jnp.mean(comb, axis=1, keepdims=True)                 # (BE, 1) mean over time
        scaled = feat * fcwrep_ref[...]                              # (BE, OUT_PAD)
        out_ref[...] = (jnp.dot(gsel_ref[...], scaled,
                                preferred_element_type=jnp.float32) + fcb_ref[...])


def film_forward_pallas(x, packed):
    Bn, T, E = x.shape
    # x_in = x[:, -multiscale[s]*seq_len:] clamps to the whole input for every scale.
    xT = jnp.transpose(x, (0, 2, 1)).reshape(Bn * E, T)              # (BE, T), rows (b, e)
    xdec, out = pl.pallas_call(
        _film_fused_kernel,
        out_shape=(jax.ShapeDtypeStruct((NS, BE, SEQ_LEN), jnp.float32),
                   jax.ShapeDtypeStruct((B_PAD, OUT_PAD), jnp.float32)),
        grid=(NS,),
        in_specs=[
            pl.BlockSpec((BE, SEQ_LEN), lambda s: (0, 0)),           # xT
            pl.BlockSpec((1, SEQ_LEN, KDIM), lambda s: (s, 0, 0)),   # folded K_s
            pl.BlockSpec((1, KDIM, SEQ_LEN), lambda s: (s, 0, 0)),   # folded W_s
            pl.BlockSpec(memory_space=pltpu.MemorySpace.SMEM),       # mlp_w (NS,)
            pl.BlockSpec(memory_space=pltpu.MemorySpace.SMEM),       # mlp_b (1,)
            pl.BlockSpec((BE, OUT_PAD), lambda s: (0, 0)),           # fc weight tiled/padded
            pl.BlockSpec((B_PAD, BE), lambda s: (0, 0)),             # row-group selector
            pl.BlockSpec((1, OUT_PAD), lambda s: (0, 0)),            # fc bias (padded)
        ],
        out_specs=(pl.BlockSpec((1, BE, SEQ_LEN), lambda s: (s, 0, 0)),
                   pl.BlockSpec((B_PAD, OUT_PAD), lambda s: (0, 0))),
        scratch_shapes=[pltpu.VMEM((BE, SEQ_LEN), jnp.float32)],     # mlp-combine accumulator
        compiler_params=pltpu.CompilerParams(dimension_semantics=("arbitrary",)),
    )(xT, packed['K'], packed['W'], packed['mlp_w'], packed['mlp_b'],
      packed['fcw_rep'], packed['gsel'], packed['fcb_pad'])
    return out[:Bn, :OUT_DIM], xdec.reshape(NS, Bn, E, SEQ_LEN)


# ------------------------------ pure-JAX reference -----------------------------
def film_forward_reference(x, p):
    Bn, T, E = x.shape
    x_decs = []
    for s in range(NS):
        AdT, Bd, Em = p['AdT'][s], p['Bd'][s], p['Em'][s]
        fs = jnp.transpose(x, (1, 0, 2))                                # (T, B, E)

        def step(c, f):
            c_new = jnp.matmul(c, AdT) + f[..., None] * Bd
            return c_new, c_new

        c0 = jnp.zeros((Bn, E, N_ORDER), jnp.float32)
        _, cs = jax.lax.scan(step, c0, fs)                              # (T, B, E, N)
        x_in_c = jnp.transpose(cs, (1, 2, 3, 0))                        # (B, E, N, T)
        x_ft = jnp.fft.rfft(x_in_c, axis=-1)
        a = x_ft[..., :MODES2]
        a = jnp.einsum('bjix,ih->bjhx', a, p['w0'][s])
        a = jnp.einsum('bjhx,hkx->bjkx', a, p['w1'][s])
        om = jnp.einsum('bjkx,ko->bjox', a, p['w2'][s])
        out_ft = jnp.zeros(x_ft.shape, jnp.complex64).at[..., :MODES2].set(om)
        xo = jnp.fft.irfft(out_ft, n=T, axis=-1)                        # (B, E, N, T)
        x_dec_c = xo[:, :, :, SEQ_LEN - 1]                              # (B, E, N)
        x_decs.append(jnp.matmul(x_dec_c, Em[-SEQ_LEN:, :].T))          # (B, E, L)
    stacked = jnp.stack(x_decs, axis=-1)                                # (B, E, L, NS)
    x_dec = jnp.einsum('beto,o->bet', stacked, p['mlp_w']) + p['mlp_b'][0]
    feat = jnp.mean(x_dec, axis=-1)                                     # (B, E)
    out = jnp.matmul(feat, p['fc_wT']) + p['fc_b']
    return out, jnp.stack(x_decs, axis=0)                               # (B, O), (NS, B, E, L)


# ------------------------------------ main -------------------------------------
if __name__ == "__main__":
    key = jax.random.PRNGKey(0)
    k_x, k_p = jax.random.split(key)
    x = jax.random.normal(k_x, (BATCH, SEQ_LEN, ENC_IN), dtype=jnp.float32)
    params = init_params(k_p)
    packed = pack_for_pallas(params)

    fwd = jax.jit(film_forward_pallas)
    out, xdec = fwd(x, packed)
    out = jax.block_until_ready(out)
    assert out.shape == (BATCH, OUT_DIM)

    ref_out, ref_xdec = film_forward_reference(x, params)
    ref_out = jax.block_until_ready(ref_out)

    out_np, ref_np = np.asarray(out), np.asarray(ref_out)
    xdec_np, ref_xdec_np = np.asarray(xdec), np.asarray(ref_xdec)
    assert np.all(np.isfinite(out_np))
    np.testing.assert_allclose(
        xdec_np, ref_xdec_np, rtol=2e-2,
        atol=2e-2 * float(np.max(np.abs(ref_xdec_np))) + 1e-12)
    np.testing.assert_allclose(
        out_np, ref_np, rtol=2e-2,
        atol=2e-2 * float(np.max(np.abs(ref_np))) + 1e-6)

    print("KERNEL_OK")
</pallas_src>

<mosaic_0001>
module attributes {stable_mosaic.version = 11 : i64} {
  func.func @_film_fused_kernel(%arg0: i32, %arg1: memref<16x16xf32, #tpu.memory_space<vmem>>, %arg2: memref<1x16x2048xf32, #tpu.memory_space<vmem>>, %arg3: memref<1x2048x16xf32, #tpu.memory_space<vmem>>, %arg4: memref<3xf32, #tpu.memory_space<smem>>, %arg5: memref<1xf32, #tpu.memory_space<smem>>, %arg6: memref<16x128xf32, #tpu.memory_space<vmem>>, %arg7: memref<8x16xf32, #tpu.memory_space<vmem>>, %arg8: memref<1x128xf32, #tpu.memory_space<vmem>>, %arg9: memref<1x16x16xf32, #tpu.memory_space<vmem>>, %arg10: memref<8x128xf32, #tpu.memory_space<vmem>>, %arg11: memref<16x16xf32, #tpu.memory_space<vmem>>) attributes {dimension_semantics = [#tpu.dimension_semantics<arbitrary>], iteration_bounds = array<i64: 3>, scalar_prefetch = 0 : i64, scratch_operands = 1 : i64, tpu.core_type = #tpu.core_type<tc>, window_params = [{pipeline_mode = #tpu.pipeline_mode<synchronous>, transform_indices = @transform_0, window_bounds = array<i64: 16, 16>}, {transform_indices = @transform_1, window_bounds = array<i64: 1, 16, 2048>}, {transform_indices = @transform_2, window_bounds = array<i64: 1, 2048, 16>}, {transform_indices = @transform_3, window_bounds = array<i64: 3>}, {transform_indices = @transform_4, window_bounds = array<i64: 1>}, {pipeline_mode = #tpu.pipeline_mode<synchronous>, transform_indices = @transform_5, window_bounds = array<i64: 16, 128>}, {pipeline_mode = #tpu.pipeline_mode<synchronous>, transform_indices = @transform_6, window_bounds = array<i64: 8, 16>}, {pipeline_mode = #tpu.pipeline_mode<synchronous>, transform_indices = @transform_7, window_bounds = array<i64: 1, 128>}, {transform_indices = @transform_8, window_bounds = array<i64: 1, 16, 16>}, {pipeline_mode = #tpu.pipeline_mode<synchronous>, transform_indices = @transform_9, window_bounds = array<i64: 8, 128>}]} {
    %c0 = arith.constant 0 : index
    %c0_0 = arith.constant 0 : index
    %0 = vector.load %arg1[%c0, %c0_0] : memref<16x16xf32, #tpu.memory_space<vmem>>, vector<16x16xf32>
    %c0_1 = arith.constant 0 : index
    %c0_2 = arith.constant 0 : index
    %c0_3 = arith.constant 0 : index
    %1 = vector.load %arg2[%c0_1, %c0_2, %c0_3] : memref<1x16x2048xf32, #tpu.memory_space<vmem>>, vector<1x16x2048xf32>
    %2 = vector.shape_cast %1 : vector<1x16x2048xf32> to vector<16x2048xf32>
    %cst = arith.constant dense<0.000000e+00> : vector<16x2048xf32>
    %3 = tpu.matmul %0, %2, %cst {dimension_numbers = #tpu.dot_dimension_numbers<[1], [0], [0], [1], [0, 0, 1, 1], [], []>} : vector<16x16xf32>, vector<16x2048xf32>, vector<16x2048xf32> -> vector<16x2048xf32>
    %c0_4 = arith.constant 0 : index
    %c0_5 = arith.constant 0 : index
    %c0_6 = arith.constant 0 : index
    %4 = vector.load %arg3[%c0_4, %c0_5, %c0_6] : memref<1x2048x16xf32, #tpu.memory_space<vmem>>, vector<1x2048x16xf32>
    %5 = vector.shape_cast %4 : vector<1x2048x16xf32> to vector<2048x16xf32>
    %cst_7 = arith.constant dense<0.000000e+00> : vector<16x16xf32>
    %6 = tpu.matmul %3, %5, %cst_7 {dimension_numbers = #tpu.dot_dimension_numbers<[1], [0], [0], [1], [0, 0, 1, 1], [], []>} : vector<16x2048xf32>, vector<2048x16xf32>, vector<16x16xf32> -> vector<16x16xf32>
    %c0_8 = arith.constant 0 : index
    %c0_9 = arith.constant 0 : index
    %c0_10 = arith.constant 0 : index
    %7 = vector.load %arg9[%c0_8, %c0_9, %c0_10] : memref<1x16x16xf32, #tpu.memory_space<vmem>>, vector<1x16x16xf32>
    %8 = vector.shape_cast %7 : vector<1x16x16xf32> to vector<16x16xf32>
    %9 = vector.shape_cast %6 : vector<16x16xf32> to vector<1x16x16xf32>
    tpu.vector_store %arg9[%c0_8, %c0_9, %c0_10], %9 {strides = array<i32>} : memref<1x16x16xf32, #tpu.memory_space<vmem>>, vector<1x16x16xf32>,
    %c0_i32 = arith.constant 0 : i32
    %10 = arith.cmpi eq, %arg0, %c0_i32 : i32
    %11 = arith.extui %10 : i1 to i32
    %c0_i32_11 = arith.constant 0 : i32
    %12 = arith.cmpi ne, %11, %c0_i32_11 : i32
    scf.if %12 {
      %cst_17 = arith.constant 0.000000e+00 : f32
      %23 = vector.broadcast %cst_17 : f32 to vector<16x16xf32>
      %c0_18 = arith.constant 0 : index
      %c0_19 = arith.constant 0 : index
      %24 = vector.load %arg11[%c0_18, %c0_19] : memref<16x16xf32, #tpu.memory_space<vmem>>, vector<16x16xf32>
      tpu.vector_store %arg11[%c0_18, %c0_19], %23 {strides = array<i32>} : memref<16x16xf32, #tpu.memory_space<vmem>>, vector<16x16xf32>,
    } else {
    }
    %c0_12 = arith.constant 0 : index
    %c0_13 = arith.constant 0 : index
    %13 = vector.load %arg11[%c0_12, %c0_13] : memref<16x16xf32, #tpu.memory_space<vmem>>, vector<16x16xf32>
    %14 = arith.index_cast %arg0 : i32 to index
    %15 = memref.load %arg4[%14] : memref<3xf32, #tpu.memory_space<smem>>
    %16 = vector.broadcast %15 : f32 to vector<16x16xf32>
    %17 = arith.mulf %16, %6 : vector<16x16xf32>
    %18 = arith.addf %13, %17 : vector<16x16xf32>
    %c0_14 = arith.constant 0 : index
    %c0_15 = arith.constant 0 : index
    %19 = vector.load %arg11[%c0_14, %c0_15] : memref<16x16xf32, #tpu.memory_space<vmem>>, vector<16x16xf32>
    tpu.vector_store %arg11[%c0_14, %c0_15], %18 {strides = array<i32>} : memref<16x16xf32, #tpu.memory_space<vmem>>, vector<16x16xf32>,
    %c2_i32 = arith.constant 2 : i32
    %20 = arith.cmpi eq, %arg0, %c2_i32 : i32
    %21 = arith.extui %20 : i1 to i32
    %c0_i32_16 = arith.constant 0 : i32
    %22 = arith.cmpi ne, %21, %c0_i32_16 : i32
    scf.if %22 {
      %c0_17 = arith.constant 0 : index
      %c0_18 = arith.constant 0 : index
      %23 = vector.load %arg11[%c0_17, %c0_18] : memref<16x16xf32, #tpu.memory_space<vmem>>, vector<16x16xf32>
      %c0_19 = arith.constant 0 : index
      %24 = memref.load %arg5[%c0_19] : memref<1xf32, #tpu.memory_space<smem>>
      %25 = vector.broadcast %24 : f32 to vector<16x16xf32>
      %26 = arith.addf %23, %25 : vector<16x16xf32>
      %cst_20 = arith.constant dense<0.000000e+00> : vector<16xf32>
      %27 = vector.multi_reduction <add>, %26, %cst_20 [1] : vector<16x16xf32> to vector<16xf32>
      %28 = vector.shape_cast %27 : vector<16xf32> to vector<16x1xf32>
      %cst_21 = arith.constant 1.600000e+01 : f32
      %29 = vector.broadcast %cst_21 : f32 to vector<16x1xf32>
      %30 = arith.divf %28, %29 : vector<16x1xf32>
      %c0_22 = arith.constant 0 : index
      %c0_23 = arith.constant 0 : index
      %31 = vector.load %arg6[%c0_22, %c0_23] : memref<16x128xf32, #tpu.memory_space<vmem>>, vector<16x128xf32>
      %32 = vector.broadcast %30 : vector<16x1xf32> to vector<16x128xf32>
      %33 = arith.mulf %32, %31 : vector<16x128xf32>
      %c0_24 = arith.constant 0 : index
      %c0_25 = arith.constant 0 : index
      %34 = vector.load %arg7[%c0_24, %c0_25] : memref<8x16xf32, #tpu.memory_space<vmem>>, vector<8x16xf32>
      %cst_26 = arith.constant dense<0.000000e+00> : vector<8x128xf32>
      %35 = tpu.matmul %34, %33, %cst_26 {dimension_numbers = #tpu.dot_dimension_numbers<[1], [0], [0], [1], [0, 0, 1, 1], [], []>} : vector<8x16xf32>, vector<16x128xf32>, vector<8x128xf32> -> vector<8x128xf32>
      %c0_27 = arith.constant 0 : index
      %c0_28 = arith.constant 0 : index
      %36 = vector.load %arg8[%c0_27, %c0_28] : memref<1x128xf32, #tpu.memory_space<vmem>>, vector<1x128xf32>
      %37 = vector.broadcast %36 : vector<1x128xf32> to vector<8x128xf32>
      %38 = arith.addf %35, %37 : vector<8x128xf32>
      %c0_29 = arith.constant 0 : index
      %c0_30 = arith.constant 0 : index
      %39 = vector.load %arg10[%c0_29, %c0_30] : memref<8x128xf32, #tpu.memory_space<vmem>>, vector<8x128xf32>
      tpu.vector_store %arg10[%c0_29, %c0_30], %38 {strides = array<i32>} : memref<8x128xf32, #tpu.memory_space<vmem>>, vector<8x128xf32>,
    } else {
    }
    return
  }
  func.func @transform_0(%arg0: i32) -> (i32, i32) {
    %c0_i32 = arith.constant 0 : i32
    %c0_i32_0 = arith.constant 0 : i32
    %c0_i32_1 = arith.constant 0 : i32
    return %c0_i32, %c0_i32_0 : i32, i32
  }
  func.func @transform_1(%arg0: i32) -> (i32, i32, i32) {
    %c0_i32 = arith.constant 0 : i32
    %c0_i32_0 = arith.constant 0 : i32
    %c0_i32_1 = arith.constant 0 : i32
    return %arg0, %c0_i32, %c0_i32_0 : i32, i32, i32
  }
  func.func @transform_2(%arg0: i32) -> (i32, i32, i32) {
    %c0_i32 = arith.constant 0 : i32
    %c0_i32_0 = arith.constant 0 : i32
    %c0_i32_1 = arith.constant 0 : i32
    return %arg0, %c0_i32, %c0_i32_0 : i32, i32, i32
  }
  func.func @transform_3(%arg0: i32) -> i32 {
    %c0_i32 = arith.constant 0 : i32
    %c0_i32_0 = arith.constant 0 : i32
    return %c0_i32 : i32
  }
  func.func @transform_4(%arg0: i32) -> i32 {
    %c0_i32 = arith.constant 0 : i32
    %c0_i32_0 = arith.constant 0 : i32
    return %c0_i32 : i32
  }
  func.func @transform_5(%arg0: i32) -> (i32, i32) {
    %c0_i32 = arith.constant 0 : i32
    %c0_i32_0 = arith.constant 0 : i32
    %c0_i32_1 = arith.constant 0 : i32
    return %c0_i32, %c0_i32_0 : i32, i32
  }
  func.func @transform_6(%arg0: i32) -> (i32, i32) {
    %c0_i32 = arith.constant 0 : i32
    %c0_i32_0 = arith.constant 0 : i32
    %c0_i32_1 = arith.constant 0 : i32
    return %c0_i32, %c0_i32_0 : i32, i32
  }
  func.func @transform_7(%arg0: i32) -> (i32, i32) {
    %c0_i32 = arith.constant 0 : i32
    %c0_i32_0 = arith.constant 0 : i32
    %c0_i32_1 = arith.constant 0 : i32
    return %c0_i32, %c0_i32_0 : i32, i32
  }
  func.func @transform_8(%arg0: i32) -> (i32, i32, i32) {
    %c0_i32 = arith.constant 0 : i32
    %c0_i32_0 = arith.constant 0 : i32
    %c0_i32_1 = arith.constant 0 : i32
    return %arg0, %c0_i32, %c0_i32_0 : i32, i32, i32
  }
  func.func @transform_9(%arg0: i32) -> (i32, i32) {
    %c0_i32 = arith.constant 0 : i32
    %c0_i32_0 = arith.constant 0 : i32
    %c0_i32_1 = arith.constant 0 : i32
    return %c0_i32, %c0_i32_0 : i32, i32
  }
}

</mosaic_0001>

<llo_original>
// kernel: film_forward_pallas.1
$region0: #{film_forward_pallas.1}
  #allocation0 [shape = 'u32[]', space=smem, size = 0x4, offset = 0x4, fixed_abs, tag = 'smem constant byte address 0x4 - core index']
  #allocation1 [shape = 'u32[144,128]{1,0:T(1,128)}', space=vmem, size = 0x12000, scoped, tag = 'internal scratch']
  #allocation2 [shape = 'f32[16,16]{1,0:T(8,128)}', space=vmem, size = 0x2000, scoped, tag = 'scratch operand']
  #allocation3 [shape = 'f32[1]{0:T(128)S(6)}', space=smem, size = 0x200, scoped, tag = 'scoped memory for film_forward_pallas.1']
  %s0 = inlined_call_operand.vmem [shape: f32[16,16], index: 0, kind: input, shape index: {}]
  %s1 = inlined_call_operand.vmem [shape: f32[3,16,2048], index: 1, kind: input, shape index: {}]
  %s2 = inlined_call_operand.vmem [shape: f32[3,2048,16], index: 2, kind: input, shape index: {}]
  %s3 = inlined_call_operand.vmem [shape: f32[3], index: 3, kind: input, shape index: {}]
  %s4 = inlined_call_operand.<no memory space> [shape: f32[1], index: 4, kind: input, shape index: {}]
  %s5 = inlined_call_operand.vmem [shape: f32[16,128], index: 5, kind: input, shape index: {}]
  %s6 = inlined_call_operand.vmem [shape: f32[8,16], index: 6, kind: input, shape index: {}]
  %s7 = inlined_call_operand.vmem [shape: f32[1,128], index: 7, kind: input, shape index: {}]
  %s8 = inlined_call_operand.hbm [shape: f32[3,16,16], index: 8, kind: output, shape index: {0}]
  %s9 = inlined_call_operand.vmem [shape: f32[8,128], index: 9, kind: output, shape index: {1}]
  %10 = xla_tuple %s8, %s9
  %s11 = sld [smem:[#allocation0]]
  $region85: #{film_forward_pallas.1} parent=0
    _
  %s13 = ssub.s32 1, %s11
  %s14 = scalar_select 0, %s13, %s11
  %15 = sst [smem:[#allocation3]] %s4
  $region1: #{film_forward_pallas.1} parent=0
    #allocation4 [shape = 'u8[512]{0}', space=smem, size = 0x200, scoped, tag = 'input window, operand 3, single buffered']
    #allocation5 [shape = 's32[2]{0}', space=sflag, size = 0x8, scoped, tag = 'scoped memory for film_forward_pallas.1']
    #allocation6 [shape = 's32[2]{0}', space=sflag, size = 0x8, scoped, tag = 'scoped memory for film_forward_pallas.1']
    #allocation7 [shape = 'u8[16384]{0}', space=vmem, size = 0x4000, scoped, tag = 'output window, operand 0']
    %16 = vsyncpa [#allocation6], 0
    %17 = vsyncpa [#allocation5], 0
    %s18 = scalar_lea.sflag [#allocation5], 1
    %19 = vsyncpa %s18, 0
    loop: start=0, step=1, limit=5
    $region2: #{film_forward_pallas.1} parent=1 // loop_pre_header
      _
    $region3: #{film_forward_pallas.1} parent=1 // loop_header
      %s21 = sphi 0, %s25
      %p22 = scmp.ge.s32.totalorder %s21, 5
      %s29 = sphi 0, %s29
      %s31 = sphi 0, %s29
      %s32 = sphi 0, %s31
      %s46 = sphi 0, %s32
      %s52 = sphi 0, %s54
      %s55 = sphi 0, %s52
      %s56 = sphi 0, %s55
      %s72 = sphi 0, %s56
      %s78 = sphi 0, %s80
      %s81 = sphi 0, %s78
      %s82 = sphi 0, %s81
      %s98 = sphi 0, %s82
      %s102 = sphi 0, %s102
      %s104 = sphi 0, %s102
      %s105 = sphi 0, %s104
      %s119 = sphi 0, %s105
      %s123 = sphi 0, %s123
      %s125 = sphi 0, %s123
      %s126 = sphi 0, %s125
      %s140 = sphi 0, %s126
      %s144 = sphi 0, %s144
      %s146 = sphi 0, %s144
      %s147 = sphi 0, %s146
      %s161 = sphi 0, %s147
      %s165 = sphi 0, %s165
      %s167 = sphi 0, %s165
      %s168 = sphi 0, %s167
      %s182 = sphi 0, %s168
      %s186 = sphi 0, %s186
      %s188 = sphi 0, %s186
      %s189 = sphi 0, %s188
      %s203 = sphi 0, %s189
      %s209 = sphi 0, %s211
      %s212 = sphi 0, %s209
      %s213 = sphi 0, %s212
      %s229 = sphi 0, %s213
      %s233 = sphi 0, %s233
      %s235 = sphi 0, %s233
      %s236 = sphi 0, %s235
      %s250 = sphi 0, %s236
    $region4: #{film_forward_pallas.1} parent=1 // loop_header_branch
      %24 = sbr.rel (%p22) target = $region8
    $region5: #{film_forward_pallas.1} parent=1 // loop_body
      %s26 = ssub.s32 %s21, 1
      %s27 = ssub.s32 %s21, 2
      %s28 = sadd.s32 %s21, 1
      %s30 = sadd.s32 %s29, 1
      %p33 = scmp.eq.s32.totalorder %s21, 2
      %p34 = scmp.ne.s32.totalorder %s29, %s31
      %p35 = scmp.eq.s32.totalorder %s21, 0
      %p36 = por %p34, %p35
      %p37 = scmp.ne.s32.totalorder %s29, %s31
      %p38 = scmp.eq.s32.totalorder %s26, 2
      %p39 = por %p37, %p38
      %p40 = scmp.ne.s32.totalorder %s31, %s32
      %p41 = scmp.eq.s32.totalorder %s26, 0
      %p42 = por %p40, %p41
      %p43 = scmp.ne.s32.totalorder %s31, %s32
      %p44 = scmp.eq.s32.totalorder %s27, 2
      %p45 = por %p43, %p44
      %p47 = scmp.ne.s32.totalorder %s32, %s46
      %p48 = scmp.eq.s32.totalorder %s27, 0
      %p49 = por %p47, %p48
      %s50 = ssub.s32 %s21, %s28
      %p51 = scmp.eq.s32.totalorder %s50, 0
      %s53 = sadd.s32 %s52, 1
      %s54 = scalar_select %p51, %s52, %s53
      %p57 = pneg %p51
      %p58 = scmp.eq.s32.totalorder %s21, 2
      %p59 = por %p57, %p58
      %p60 = scmp.ne.s32.totalorder %s52, %s55
      %p61 = scmp.eq.s32.totalorder %s21, 0
      %p62 = por %p60, %p61
      %p63 = scmp.ne.s32.totalorder %s52, %s55
      %p64 = scmp.eq.s32.totalorder %s26, 2
      %p65 = por %p63, %p64
      %p66 = scmp.ne.s32.totalorder %s55, %s56
      %p67 = scmp.eq.s32.totalorder %s26, 0
      %p68 = por %p66, %p67
      %p69 = scmp.ne.s32.totalorder %s55, %s56
      %p70 = scmp.eq.s32.totalorder %s27, 2
      %p71 = por %p69, %p70
      %p73 = scmp.ne.s32.totalorder %s56, %s72
      %p74 = scmp.eq.s32.totalorder %s27, 0
      %p75 = por %p73, %p74
      %s76 = ssub.s32 %s21, %s28
      %p77 = scmp.eq.s32.totalorder %s76, 0
      %s79 = sadd.s32 %s78, 1
      %s80 = scalar_select %p77, %s78, %s79
      %p83 = pneg %p77
      %p84 = scmp.eq.s32.totalorder %s21, 2
      %p85 = por %p83, %p84
      %p86 = scmp.ne.s32.totalorder %s78, %s81
      %p87 = scmp.eq.s32.totalorder %s21, 0
      %p88 = por %p86, %p87
      %p89 = scmp.ne.s32.totalorder %s78, %s81
      %p90 = scmp.eq.s32.totalorder %s26, 2
      %p91 = por %p89, %p90
      %p92 = scmp.ne.s32.totalorder %s81, %s82
      %p93 = scmp.eq.s32.totalorder %s26, 0
      %p94 = por %p92, %p93
      %p95 = scmp.ne.s32.totalorder %s81, %s82
      %p96 = scmp.eq.s32.totalorder %s27, 2
      %p97 = por %p95, %p96
      %p99 = scmp.ne.s32.totalorder %s82, %s98
      %p100 = scmp.eq.s32.totalorder %s27, 0
      %p101 = por %p99, %p100
      %s103 = sadd.s32 %s102, 1
      %p106 = scmp.eq.s32.totalorder %s21, 2
      %p107 = scmp.ne.s32.totalorder %s102, %s104
      %p108 = scmp.eq.s32.totalorder %s21, 0
      %p109 = por %p107, %p108
      %p110 = scmp.ne.s32.totalorder %s102, %s104
      %p111 = scmp.eq.s32.totalorder %s26, 2
      %p112 = por %p110, %p111
      %p113 = scmp.ne.s32.totalorder %s104, %s105
      %p114 = scmp.eq.s32.totalorder %s26, 0
      %p115 = por %p113, %p114
      %p116 = scmp.ne.s32.totalorder %s104, %s105
      %p117 = scmp.eq.s32.totalorder %s27, 2
      %p118 = por %p116, %p117
      %p120 = scmp.ne.s32.totalorder %s105, %s119
      %p121 = scmp.eq.s32.totalorder %s27, 0
      %p122 = por %p120, %p121
      %s124 = sadd.s32 %s123, 1
      %p127 = scmp.eq.s32.totalorder %s21, 2
      %p128 = scmp.ne.s32.totalorder %s123, %s125
      %p129 = scmp.eq.s32.totalorder %s21, 0
      %p130 = por %p128, %p129
      %p131 = scmp.ne.s32.totalorder %s123, %s125
      %p132 = scmp.eq.s32.totalorder %s26, 2
      %p133 = por %p131, %p132
      %p134 = scmp.ne.s32.totalorder %s125, %s126
      %p135 = scmp.eq.s32.totalorder %s26, 0
      %p136 = por %p134, %p135
      %p137 = scmp.ne.s32.totalorder %s125, %s126
      %p138 = scmp.eq.s32.totalorder %s27, 2
      %p139 = por %p137, %p138
      %p141 = scmp.ne.s32.totalorder %s126, %s140
      %p142 = scmp.eq.s32.totalorder %s27, 0
      %p143 = por %p141, %p142
      %s145 = sadd.s32 %s144, 1
      %p148 = scmp.eq.s32.totalorder %s21, 2
      %p149 = scmp.ne.s32.totalorder %s144, %s146
      %p150 = scmp.eq.s32.totalorder %s21, 0
      %p151 = por %p149, %p150
      %p152 = scmp.ne.s32.totalorder %s144, %s146
      %p153 = scmp.eq.s32.totalorder %s26, 2
      %p154 = por %p152, %p153
      %p155 = scmp.ne.s32.totalorder %s146, %s147
      %p156 = scmp.eq.s32.totalorder %s26, 0
      %p157 = por %p155, %p156
      %p158 = scmp.ne.s32.totalorder %s146, %s147
      %p159 = scmp.eq.s32.totalorder %s27, 2
      %p160 = por %p158, %p159
      %p162 = scmp.ne.s32.totalorder %s147, %s161
      %p163 = scmp.eq.s32.totalorder %s27, 0
      %p164 = por %p162, %p163
      %s166 = sadd.s32 %s165, 1
      %p169 = scmp.eq.s32.totalorder %s21, 2
      %p170 = scmp.ne.s32.totalorder %s165, %s167
      %p171 = scmp.eq.s32.totalorder %s21, 0
      %p172 = por %p170, %p171
      %p173 = scmp.ne.s32.totalorder %s165, %s167
      %p174 = scmp.eq.s32.totalorder %s26, 2
      %p175 = por %p173, %p174
      %p176 = scmp.ne.s32.totalorder %s167, %s168
      %p177 = scmp.eq.s32.totalorder %s26, 0
      %p178 = por %p176, %p177
      %p179 = scmp.ne.s32.totalorder %s167, %s168
      %p180 = scmp.eq.s32.totalorder %s27, 2
      %p181 = por %p179, %p180
      %p183 = scmp.ne.s32.totalorder %s168, %s182
      %p184 = scmp.eq.s32.totalorder %s27, 0
      %p185 = por %p183, %p184
      %s187 = sadd.s32 %s186, 1
      %p190 = scmp.eq.s32.totalorder %s21, 2
      %p191 = scmp.ne.s32.totalorder %s186, %s188
      %p192 = scmp.eq.s32.totalorder %s21, 0
      %p193 = por %p191, %p192
      %p194 = scmp.ne.s32.totalorder %s186, %s188
      %p195 = scmp.eq.s32.totalorder %s26, 2
      %p196 = por %p194, %p195
      %p197 = scmp.ne.s32.totalorder %s188, %s189
      %p198 = scmp.eq.s32.totalorder %s26, 0
      %p199 = por %p197, %p198
      %p200 = scmp.ne.s32.totalorder %s188, %s189
      %p201 = scmp.eq.s32.totalorder %s27, 2
      %p202 = por %p200, %p201
      %p204 = scmp.ne.s32.totalorder %s189, %s203
      %p205 = scmp.eq.s32.totalorder %s27, 0
      %p206 = por %p204, %p205
      %s207 = ssub.s32 %s21, %s28
      %p208 = scmp.eq.s32.totalorder %s207, 0
      %s210 = sadd.s32 %s209, 1
      %s211 = scalar_select %p208, %s209, %s210
      %p214 = pneg %p208
      %p215 = scmp.eq.s32.totalorder %s21, 2
      %p216 = por %p214, %p215
      %p217 = scmp.ne.s32.totalorder %s209, %s212
      %p218 = scmp.eq.s32.totalorder %s21, 0
      %p219 = por %p217, %p218
      %p220 = scmp.ne.s32.totalorder %s209, %s212
      %p221 = scmp.eq.s32.totalorder %s26, 2
      %p222 = por %p220, %p221
      %p223 = scmp.ne.s32.totalorder %s212, %s213
      %p224 = scmp.eq.s32.totalorder %s26, 0
      %p225 = por %p223, %p224
      %p226 = scmp.ne.s32.totalorder %s212, %s213
      %p227 = scmp.eq.s32.totalorder %s27, 2
      %p228 = por %p226, %p227
      %p230 = scmp.ne.s32.totalorder %s213, %s229
      %p231 = scmp.eq.s32.totalorder %s27, 0
      %p232 = por %p230, %p231
      %s234 = sadd.s32 %s233, 1
      %p237 = scmp.eq.s32.totalorder %s21, 2
      %p238 = scmp.ne.s32.totalorder %s233, %s235
      %p239 = scmp.eq.s32.totalorder %s21, 0
      %p240 = por %p238, %p239
      %p241 = scmp.ne.s32.totalorder %s233, %s235
      %p242 = scmp.eq.s32.totalorder %s26, 2
      %p243 = por %p241, %p242
      %p244 = scmp.ne.s32.totalorder %s235, %s236
      %p245 = scmp.eq.s32.totalorder %s26, 0
      %p246 = por %p244, %p245
      %p247 = scmp.ne.s32.totalorder %s235, %s236
      %p248 = scmp.eq.s32.totalorder %s27, 2
      %p249 = por %p247, %p248
      %p251 = scmp.ne.s32.totalorder %s236, %s250
      %p252 = scmp.eq.s32.totalorder %s27, 0
      %p253 = por %p251, %p252
      %p254 = scmp.le.s32.totalorder 1, %s21
      %p255 = scmp.lt.s32.totalorder %s21, 4
      %p256 = pnand %p254, %p255
      %p257 = pneg %p256
      // Predicated region
      $region9: #{film_forward_pallas.1} parent=5 // pred_check
        _
      $region10: #{film_forward_pallas.1} parent=5 // pred_check_branch
        %259 = sbr.rel (%p256) target = $region12
      $region11: #{film_forward_pallas.1} parent=5 // pred_region
        %s260 = ssub.s32 %s21, 1
        // Predicated region
        $region13: #{film_forward_pallas.1} parent=11 // pred_check
          %p261 = pneg %p42
        $region14: #{film_forward_pallas.1} parent=11 // pred_check_branch
          %263 = sbr.rel (%p261) target = $region16
        $region15: #{film_forward_pallas.1} parent=11 // pred_region
          _
        $region16: #{film_forward_pallas.1} parent=11 // pred_fallthru
          _
        // Predicated region
        $region17: #{film_forward_pallas.1} parent=11 // pred_check
          %p264 = pneg %p115
        $region18: #{film_forward_pallas.1} parent=11 // pred_check_branch
          %266 = sbr.rel (%p264) target = $region20
        $region19: #{film_forward_pallas.1} parent=11 // pred_region
          %s268 = ssub.s32 16, 16
          %269 = vsyncadd [#allocation6], %s268
          %s271 = sshll.u32 %s3, 4
          %s272 = int_to_ptr.vmem [resolvable:$true] %s271
          %274 = dma.vmem_to_smem %s272, 16, [#allocation4], [#allocation6]
        $region20: #{film_forward_pallas.1} parent=11 // pred_fallthru
          _
        // Predicated region
        $region21: #{film_forward_pallas.1} parent=11 // pred_check
          %p275 = pneg %p136
        $region22: #{film_forward_pallas.1} parent=11 // pred_check_branch
          %277 = sbr.rel (%p275) target = $region24
        $region23: #{film_forward_pallas.1} parent=11 // pred_region
          _
        $region24: #{film_forward_pallas.1} parent=11 // pred_fallthru
          _
        // Predicated region
        $region25: #{film_forward_pallas.1} parent=11 // pred_check
          %p278 = pneg %p157
        $region26: #{film_forward_pallas.1} parent=11 // pred_check_branch
          %280 = sbr.rel (%p278) target = $region28
        $region27: #{film_forward_pallas.1} parent=11 // pred_region
          _
        $region28: #{film_forward_pallas.1} parent=11 // pred_fallthru
          _
        // Predicated region
        $region29: #{film_forward_pallas.1} parent=11 // pred_check
          %p281 = pneg %p178
        $region30: #{film_forward_pallas.1} parent=11 // pred_check_branch
          %283 = sbr.rel (%p281) target = $region32
        $region31: #{film_forward_pallas.1} parent=11 // pred_region
          _
        $region32: #{film_forward_pallas.1} parent=11 // pred_fallthru
          _
        // Predicated region
        $region33: #{film_forward_pallas.1} parent=11 // pred_check
          %p284 = pneg %p199
        $region34: #{film_forward_pallas.1} parent=11 // pred_check_branch
          %286 = sbr.rel (%p284) target = $region36
        $region35: #{film_forward_pallas.1} parent=11 // pred_region
          _
        $region36: #{film_forward_pallas.1} parent=11 // pred_fallthru
          _
      $region12: #{film_forward_pallas.1} parent=5 // pred_fallthru
        _
      %p287 = scmp.lt.s32.totalorder %s21, 3
      // Predicated region
      $region37: #{film_forward_pallas.1} parent=5 // pred_check
        %p288 = pneg %p287
      $region38: #{film_forward_pallas.1} parent=5 // pred_check_branch
        %290 = sbr.rel (%p288) target = $region40
      $region39: #{film_forward_pallas.1} parent=5 // pred_region
        // Predicated region
        $region41: #{film_forward_pallas.1} parent=39 // pred_check
          %p291 = pneg %p62
        $region42: #{film_forward_pallas.1} parent=39 // pred_check_branch
          %293 = sbr.rel (%p291) target = $region44
        $region43: #{film_forward_pallas.1} parent=39 // pred_region
          %p294 = scmp.lt.s32.totalorder %s21, 2
          %s295 = scalar_select %p294, %s21, 2
          %s296 = smul.addr %s295, 32
          %s297 = smul.addr %s296, 8
          %s298 = scalar_lea.vmem %s1, %s297
        $region44: #{film_forward_pallas.1} parent=39 // pred_fallthru
          _
        // Predicated region
        $region45: #{film_forward_pallas.1} parent=39 // pred_check
          %p299 = pneg %p88
        $region46: #{film_forward_pallas.1} parent=39 // pred_check_branch
          %301 = sbr.rel (%p299) target = $region48
        $region47: #{film_forward_pallas.1} parent=39 // pred_region
          %p302 = scmp.lt.s32.totalorder %s21, 2
          %s303 = scalar_select %p302, %s21, 2
          %s304 = smul.addr %s303, 256
          %s305 = smul.addr %s304, 8
          %s306 = scalar_lea.vmem %s2, %s305
        $region48: #{film_forward_pallas.1} parent=39 // pred_fallthru
          _
      $region40: #{film_forward_pallas.1} parent=5 // pred_fallthru
        _
      %p307 = scmp.le.s32.totalorder 1, %s21
      %p308 = scmp.lt.s32.totalorder %s21, 4
      %p309 = pnand %p307, %p308
      %p310 = pneg %p309
      // Predicated region
      $region49: #{film_forward_pallas.1} parent=5 // pred_check
        _
      $region50: #{film_forward_pallas.1} parent=5 // pred_check_branch
        %312 = sbr.rel (%p309) target = $region52
      $region51: #{film_forward_pallas.1} parent=5 // pred_region
        %s313 = ssub.s32 %s21, 1
        // Predicated region
        $region53: #{film_forward_pallas.1} parent=51 // pred_check
          %p314 = pneg %p115
        $region54: #{film_forward_pallas.1} parent=51 // pred_check_branch
          %316 = sbr.rel (%p314) target = $region56
        $region55: #{film_forward_pallas.1} parent=51 // pred_region
          %317 = dma.done [#allocation6], 16
        $region56: #{film_forward_pallas.1} parent=51 // pred_fallthru
          _
        %318 = sfence
        %p319 = pneg %p42
        %p320 = pneg %p39
        %p321 = scmp.lt.s32.totalorder %s26, 2
        %s322 = scalar_select %p321, %s26, 2
        %s323 = smul.addr %s322, 32
        %s324 = smul.addr %s323, 8
        %s325 = scalar_lea.vmem %s1, %s324
        %p326 = pneg %p68
        %p327 = pneg %p65
        %p328 = scmp.lt.s32.totalorder %s26, 2
        %s329 = scalar_select %p328, %s26, 2
        %s330 = smul.addr %s329, 256
        %s331 = smul.addr %s330, 8
        %s332 = scalar_lea.vmem %s2, %s331
        %p333 = pneg %p94
        %p334 = pneg %p91
        %p335 = pneg %p115
        %p336 = pneg %p112
        %p337 = pneg %p136
        %p338 = pneg %p133
        %p339 = pneg %p157
        %p340 = pneg %p154
        %p341 = pneg %p178
        %p342 = pneg %p175
        %p343 = pneg %p199
        %p344 = pneg %p196
        %p345 = pneg %p225
        %p346 = pneg %p222
        %s347 = sand.u32 %s212, 1
        %s348 = scalar_lea.sflag [#allocation5], %s347
        %s349 = sand.u32 %s212, 1
        %s350 = smul.addr %s349, 16
        %s351 = scalar_lea.vmem [#allocation7], %s350
        %p352 = pneg %p246
        %p353 = pneg %p243
        %p354 = scmp.lt.s32.totalorder %s26, 2
        %s355 = scalar_select %p354, %s26, 2
        %s356 = smul.addr %s355, 32
        %s357 = smul.addr %s356, 8
        %s358 = scalar_lea.vmem %s1, %s357
        %p359 = scmp.lt.s32.totalorder %s26, 2
        %s360 = scalar_select %p359, %s26, 2
        %s361 = smul.addr %s360, 256
        %s362 = smul.addr %s361, 8
        %s363 = scalar_lea.vmem %s2, %s362
        %v364 = vld [vmem:[%s0] sm:$0xff]
        %v365 = vld [vmem:[%s0 + $0x8] sm:$0xff]
        %v366 = vld [vmem:[%s358] sm:$0xff]
        %v367 = vld [vmem:[%s358 + $0x8] sm:$0xff]
        %v368 = vld [vmem:[%s358 + $0x10] sm:$0xff]
        %v369 = vld [vmem:[%s358 + $0x18] sm:$0xff]
        %v370 = vld [vmem:[%s358 + $0x20] sm:$0xff]
        %v371 = vld [vmem:[%s358 + $0x28] sm:$0xff]
        %v372 = vld [vmem:[%s358 + $0x30] sm:$0xff]
        %v373 = vld [vmem:[%s358 + $0x38] sm:$0xff]
        %v374 = vld [vmem:[%s358 + $0x40] sm:$0xff]
        %v375 = vld [vmem:[%s358 + $0x48] sm:$0xff]
        %v376 = vld [vmem:[%s358 + $0x50] sm:$0xff]
        %v377 = vld [vmem:[%s358 + $0x58] sm:$0xff]
        %v378 = vld [vmem:[%s358 + $0x60] sm:$0xff]
        %v379 = vld [vmem:[%s358 + $0x68] sm:$0xff]
        %v380 = vld [vmem:[%s358 + $0x70] sm:$0xff]
        %v381 = vld [vmem:[%s358 + $0x78] sm:$0xff]
        %v382 = vld [vmem:[%s358 + $0x80] sm:$0xff]
        %v383 = vld [vmem:[%s358 + $0x88] sm:$0xff]
        %v384 = vld [vmem:[%s358 + $0x90] sm:$0xff]
        %v385 = vld [vmem:[%s358 + $0x98] sm:$0xff]
        %v386 = vld [vmem:[%s358 + $0xa0] sm:$0xff]
        %v387 = vld [vmem:[%s358 + $0xa8] sm:$0xff]
        %v388 = vld [vmem:[%s358 + $0xb0] sm:$0xff]
        %v389 = vld [vmem:[%s358 + $0xb8] sm:$0xff]
        %v390 = vld [vmem:[%s358 + $0xc0] sm:$0xff]
        %v391 = vld [vmem:[%s358 + $0xc8] sm:$0xff]
        %v392 = vld [vmem:[%s358 + $0xd0] sm:$0xff]
        %v393 = vld [vmem:[%s358 + $0xd8] sm:$0xff]
        %v394 = vld [vmem:[%s358 + $0xe0] sm:$0xff]
        %v395 = vld [vmem:[%s358 + $0xe8] sm:$0xff]
        %v396 = vld [vmem:[%s358 + $0xf0] sm:$0xff]
        %v397 = vld [vmem:[%s358 + $0xf8] sm:$0xff]
        %vm398 = vcmask 130048
        %v400 = vsel %vm398, %v364, 0
        %v403 = vsel %vm398, %v365, 0
        %405 = vmatprep.subr.mxu0 %v367
        %406 = vmatpush1.msra.mxu0 %v366
        %407 = vmatprep.subr.mxu0 %v383
        %408 = vmatpush1.msra.mxu0 %v382
        %409 = vmatprep.subr.mxu0 0.0
        %410 = vmatpush1.msra.mxu0 0.0
        %411 = vmatprep.subr.mxu0 0.0
        %412 = vmatpush1.msra.mxu0 0.0
        %413 = vmatprep.subr.mxu0 0.0
        %414 = vmatpush1.msra.mxu0 0.0
        %415 = vmatprep.subr.mxu0 0.0
        %416 = vmatpush1.msra.mxu0 0.0
        %417 = vmatprep.subr.mxu0 0.0
        %418 = vmatpush1.msra.mxu0 0.0
        %419 = vmatprep.subr.mxu0 0.0
        %420 = vmatpush1.msra.mxu0 0.0
        %421 = vmatprep.subr.mxu0 0.0
        %422 = vmatpush1.msra.mxu0 0.0
        %423 = vmatprep.subr.mxu0 0.0
        %424 = vmatpush1.msra.mxu0 0.0
        %425 = vmatprep.subr.mxu0 0.0
        %426 = vmatpush1.msra.mxu0 0.0
        %427 = vmatprep.subr.mxu0 0.0
        %428 = vmatpush1.msra.mxu0 0.0
        %429 = vmatprep.subr.mxu0 0.0
        %430 = vmatpush1.msra.mxu0 0.0
        %431 = vmatprep.subr.mxu0 0.0
        %432 = vmatpush1.msra.mxu0 0.0
        %433 = vmatprep.subr.mxu0 0.0
        %434 = vmatpush1.msra.mxu0 0.0
        %435 = vmatprep.subr.mxu0 0.0
        %436 = vmatpush1.msra.mxu0 0.0
        %437 = vmatprep.subr.mxu0 0.0
        %438 = vmatpush1.msra.mxu0 0.0
        %439 = vmatprep.subr.mxu0 0.0
        %440 = vmatpush1.msra.mxu0 0.0
        %441 = vmatprep.subr.mxu0 0.0
        %442 = vmatpush1.msra.mxu0 0.0
        %443 = vmatprep.subr.mxu0 0.0
        %444 = vmatpush1.msra.mxu0 0.0
        %445 = vmatprep.subr.mxu0 0.0
        %446 = vmatpush1.msra.mxu0 0.0
        %447 = vmatprep.subr.mxu0 0.0
        %448 = vmatpush1.msra.mxu0 0.0
        %449 = vmatprep.subr.mxu0 0.0
        %450 = vmatpush1.msra.mxu0 0.0
        %451 = vmatprep.subr.mxu0 0.0
        %452 = vmatpush1.msra.mxu0 0.0
        %453 = vmatprep.subr.mxu0 0.0
        %454 = vmatpush1.msra.mxu0 0.0
        %455 = vmatprep.subr.mxu0 0.0
        %456 = vmatpush1.msra.mxu0 0.0
        %457 = vmatprep.subr.mxu0 0.0
        %458 = vmatpush1.msra.mxu0 0.0
        %459 = vmatprep.subr.mxu0 0.0
        %460 = vmatpush1.msra.mxu0 0.0
        %461 = vmatprep.subr.mxu0 0.0
        %462 = vmatpush1.msra.mxu0 0.0
        %463 = vmatprep.subr.mxu0 0.0
        %464 = vmatpush1.msra.mxu0 0.0
        %465 = vmatprep.subr.mxu0 0.0
        %466 = vmatpush1.msra.mxu0 0.0
        %467 = vmatprep.subr.mxu0 0.0
        %468 = vmatpush1.msra.mxu0 0.0
        %469 = vmatprep.mubr.f32.mxu0 0.0
        %470 = vmatmul.mubr.f32.gmra.mrb[0].mxu0 %v400
        %v471 = vpop.f32.mrb[0].mxu0
        %v472 = vadd.f32 0.0, %v471
        %v473 = vpop.f32.mrb[0].mxu0
        %v474 = vadd.f32 0.0, %v473
        %475 = vmatprep.mubr.f32.mxu0 0.0
        %476 = vmatmul.mubr.f32.gmra.mrb[0].mxu0 %v403
        %v477 = vpop.f32.mrb[0].mxu0
        %v478 = vadd.f32 0.0, %v477
        %v479 = vpop.f32.mrb[0].mxu0
        %v480 = vadd.f32 0.0, %v479
        %481 = vdwg.mxu0
        %482 = vmatprep.subr.mxu0 %v369
        %483 = vmatpush1.msra.mxu0 %v368
        %484 = vmatprep.subr.mxu0 %v385
        %485 = vmatpush1.msra.mxu0 %v384
        %486 = vmatprep.subr.mxu0 0.0
        %487 = vmatpush1.msra.mxu0 0.0
        %488 = vmatprep.subr.mxu0 0.0
        %489 = vmatpush1.msra.mxu0 0.0
        %490 = vmatprep.subr.mxu0 0.0
        %491 = vmatpush1.msra.mxu0 0.0
        %492 = vmatprep.subr.mxu0 0.0
        %493 = vmatpush1.msra.mxu0 0.0
        %494 = vmatprep.subr.mxu0 0.0
        %495 = vmatpush1.msra.mxu0 0.0
        %496 = vmatprep.subr.mxu0 0.0
        %497 = vmatpush1.msra.mxu0 0.0
        %498 = vmatprep.subr.mxu0 0.0
        %499 = vmatpush1.msra.mxu0 0.0
        %500 = vmatprep.subr.mxu0 0.0
        %501 = vmatpush1.msra.mxu0 0.0
        %502 = vmatprep.subr.mxu0 0.0
        %503 = vmatpush1.msra.mxu0 0.0
        %504 = vmatprep.subr.mxu0 0.0
        %505 = vmatpush1.msra.mxu0 0.0
        %506 = vmatprep.subr.mxu0 0.0
        %507 = vmatpush1.msra.mxu0 0.0
        %508 = vmatprep.subr.mxu0 0.0
        %509 = vmatpush1.msra.mxu0 0.0
        %510 = vmatprep.subr.mxu0 0.0
        %511 = vmatpush1.msra.mxu0 0.0
        %512 = vmatprep.subr.mxu0 0.0
        %513 = vmatpush1.msra.mxu0 0.0
        %514 = vmatprep.subr.mxu0 0.0
        %515 = vmatpush1.msra.mxu0 0.0
        %516 = vmatprep.subr.mxu0 0.0
        %517 = vmatpush1.msra.mxu0 0.0
        %518 = vmatprep.subr.mxu0 0.0
        %519 = vmatpush1.msra.mxu0 0.0
        %520 = vmatprep.subr.mxu0 0.0
        %521 = vmatpush1.msra.mxu0 0.0
        %522 = vmatprep.subr.mxu0 0.0
        %523 = vmatpush1.msra.mxu0 0.0
        %524 = vmatprep.subr.mxu0 0.0
        %525 = vmatpush1.msra.mxu0 0.0
        %526 = vmatprep.subr.mxu0 0.0
        %527 = vmatpush1.msra.mxu0 0.0
        %528 = vmatprep.subr.mxu0 0.0
        %529 = vmatpush1.msra.mxu0 0.0
        %530 = vmatprep.subr.mxu0 0.0
        %531 = vmatpush1.msra.mxu0 0.0
        %532 = vmatprep.subr.mxu0 0.0
        %533 = vmatpush1.msra.mxu0 0.0
        %534 = vmatprep.subr.mxu0 0.0
        %535 = vmatpush1.msra.mxu0 0.0
        %536 = vmatprep.subr.mxu0 0.0
        %537 = vmatpush1.msra.mxu0 0.0
        %538 = vmatprep.subr.mxu0 0.0
        %539 = vmatpush1.msra.mxu0 0.0
        %540 = vmatprep.subr.mxu0 0.0
        %541 = vmatpush1.msra.mxu0 0.0
        %542 = vmatprep.subr.mxu0 0.0
        %543 = vmatpush1.msra.mxu0 0.0
        %544 = vmatprep.subr.mxu0 0.0
        %545 = vmatpush1.msra.mxu0 0.0
        %546 = vmatprep.mubr.f32.mxu0 0.0
        %547 = vmatmul.mubr.f32.gmra.mrb[0].mxu0 %v400
        %v548 = vpop.f32.mrb[0].mxu0
        %v549 = vadd.f32 0.0, %v548
        %v550 = vpop.f32.mrb[0].mxu0
        %v551 = vadd.f32 0.0, %v550
        %552 = vmatprep.mubr.f32.mxu0 0.0
        %553 = vmatmul.mubr.f32.gmra.mrb[0].mxu0 %v403
        %v554 = vpop.f32.mrb[0].mxu0
        %v555 = vadd.f32 0.0, %v554
        %v556 = vpop.f32.mrb[0].mxu0
        %v557 = vadd.f32 0.0, %v556
        %558 = vdwg.mxu0
        %559 = vmatprep.subr.mxu0 %v371
        %560 = vmatpush1.msra.mxu0 %v370
        %561 = vmatprep.subr.mxu0 %v387
        %562 = vmatpush1.msra.mxu0 %v386
        %563 = vmatprep.subr.mxu0 0.0
        %564 = vmatpush1.msra.mxu0 0.0
        %565 = vmatprep.subr.mxu0 0.0
        %566 = vmatpush1.msra.mxu0 0.0
        %567 = vmatprep.subr.mxu0 0.0
        %568 = vmatpush1.msra.mxu0 0.0
        %569 = vmatprep.subr.mxu0 0.0
        %570 = vmatpush1.msra.mxu0 0.0
        %571 = vmatprep.subr.mxu0 0.0
        %572 = vmatpush1.msra.mxu0 0.0
        %573 = vmatprep.subr.mxu0 0.0
        %574 = vmatpush1.msra.mxu0 0.0
        %575 = vmatprep.subr.mxu0 0.0
        %576 = vmatpush1.msra.mxu0 0.0
        %577 = vmatprep.subr.mxu0 0.0
        %578 = vmatpush1.msra.mxu0 0.0
        %579 = vmatprep.subr.mxu0 0.0
        %580 = vmatpush1.msra.mxu0 0.0
        %581 = vmatprep.subr.mxu0 0.0
        %582 = vmatpush1.msra.mxu0 0.0
        %583 = vmatprep.subr.mxu0 0.0
        %584 = vmatpush1.msra.mxu0 0.0
        %585 = vmatprep.subr.mxu0 0.0
        %586 = vmatpush1.msra.mxu0 0.0
        %587 = vmatprep.subr.mxu0 0.0
        %588 = vmatpush1.msra.mxu0 0.0
        %589 = vmatprep.subr.mxu0 0.0
        %590 = vmatpush1.msra.mxu0 0.0
        %591 = vmatprep.subr.mxu0 0.0
        %592 = vmatpush1.msra.mxu0 0.0
        %593 = vmatprep.subr.mxu0 0.0
        %594 = vmatpush1.msra.mxu0 0.0
        %595 = vmatprep.subr.mxu0 0.0
        %596 = vmatpush1.msra.mxu0 0.0
        %597 = vmatprep.subr.mxu0 0.0
        %598 = vmatpush1.msra.mxu0 0.0
        %599 = vmatprep.subr.mxu0 0.0
        %600 = vmatpush1.msra.mxu0 0.0
        %601 = vmatprep.subr.mxu0 0.0
        %602 = vmatpush1.msra.mxu0 0.0
        %603 = vmatprep.subr.mxu0 0.0
        %604 = vmatpush1.msra.mxu0 0.0
        %605 = vmatprep.subr.mxu0 0.0
        %606 = vmatpush1.msra.mxu0 0.0
        %607 = vmatprep.subr.mxu0 0.0
        %608 = vmatpush1.msra.mxu0 0.0
        %609 = vmatprep.subr.mxu0 0.0
        %610 = vmatpush1.msra.mxu0 0.0
        %611 = vmatprep.subr.mxu0 0.0
        %612 = vmatpush1.msra.mxu0 0.0
        %613 = vmatprep.subr.mxu0 0.0
        %614 = vmatpush1.msra.mxu0 0.0
        %615 = vmatprep.subr.mxu0 0.0
        %616 = vmatpush1.msra.mxu0 0.0
        %617 = vmatprep.subr.mxu0 0.0
        %618 = vmatpush1.msra.mxu0 0.0
        %619 = vmatprep.subr.mxu0 0.0
        %620 = vmatpush1.msra.mxu0 0.0
        %621 = vmatprep.subr.mxu0 0.0
        %622 = vmatpush1.msra.mxu0 0.0
        %623 = vmatprep.mubr.f32.mxu0 0.0
        %624 = vmatmul.mubr.f32.gmra.mrb[0].mxu0 %v400
        %v625 = vpop.f32.mrb[0].mxu0
        %v626 = vadd.f32 0.0, %v625
        %v627 = vpop.f32.mrb[0].mxu0
        %v628 = vadd.f32 0.0, %v627
        %629 = vmatprep.mubr.f32.mxu0 0.0
        %630 = vmatmul.mubr.f32.gmra.mrb[0].mxu0 %v403
        %v631 = vpop.f32.mrb[0].mxu0
        %v632 = vadd.f32 0.0, %v631
        %v633 = vpop.f32.mrb[0].mxu0
        %v634 = vadd.f32 0.0, %v633
        %635 = vdwg.mxu0
        %636 = vmatprep.subr.mxu0 %v373
        %637 = vmatpush1.msra.mxu0 %v372
        %638 = vmatprep.subr.mxu0 %v389
        %639 = vmatpush1.msra.mxu0 %v388
        %640 = vmatprep.subr.mxu0 0.0
        %641 = vmatpush1.msra.mxu0 0.0
        %642 = vmatprep.subr.mxu0 0.0
        %643 = vmatpush1.msra.mxu0 0.0
        %644 = vmatprep.subr.mxu0 0.0
        %645 = vmatpush1.msra.mxu0 0.0
        %646 = vmatprep.subr.mxu0 0.0
        %647 = vmatpush1.msra.mxu0 0.0
        %648 = vmatprep.subr.mxu0 0.0
        %649 = vmatpush1.msra.mxu0 0.0
        %650 = vmatprep.subr.mxu0 0.0
        %651 = vmatpush1.msra.mxu0 0.0
        %652 = vmatprep.subr.mxu0 0.0
        %653 = vmatpush1.msra.mxu0 0.0
        %654 = vmatprep.subr.mxu0 0.0
        %655 = vmatpush1.msra.mxu0 0.0
        %656 = vmatprep.subr.mxu0 0.0
        %657 = vmatpush1.msra.mxu0 0.0
        %658 = vmatprep.subr.mxu0 0.0
        %659 = vmatpush1.msra.mxu0 0.0
        %660 = vmatprep.subr.mxu0 0.0
        %661 = vmatpush1.msra.mxu0 0.0
        %662 = vmatprep.subr.mxu0 0.0
        %663 = vmatpush1.msra.mxu0 0.0
        %664 = vmatprep.subr.mxu0 0.0
        %665 = vmatpush1.msra.mxu0 0.0
        %666 = vmatprep.subr.mxu0 0.0
        %667 = vmatpush1.msra.mxu0 0.0
        %668 = vmatprep.subr.mxu0 0.0
        %669 = vmatpush1.msra.mxu0 0.0
        %670 = vmatprep.subr.mxu0 0.0
        %671 = vmatpush1.msra.mxu0 0.0
        %672 = vmatprep.subr.mxu0 0.0
        %673 = vmatpush1.msra.mxu0 0.0
        %674 = vmatprep.subr.mxu0 0.0
        %675 = vmatpush1.msra.mxu0 0.0
        %676 = vmatprep.subr.mxu0 0.0
        %677 = vmatpush1.msra.mxu0 0.0
        %678 = vmatprep.subr.mxu0 0.0
        %679 = vmatpush1.msra.mxu0 0.0
        %680 = vmatprep.subr.mxu0 0.0
        %681 = vmatpush1.msra.mxu0 0.0
        %682 = vmatprep.subr.mxu0 0.0
        %683 = vmatpush1.msra.mxu0 0.0
        %684 = vmatprep.subr.mxu0 0.0
        %685 = vmatpush1.msra.mxu0 0.0
        %686 = vmatprep.subr.mxu0 0.0
        %687 = vmatpush1.msra.mxu0 0.0
        %688 = vmatprep.subr.mxu0 0.0
        %689 = vmatpush1.msra.mxu0 0.0
        %690 = vmatprep.subr.mxu0 0.0
        %691 = vmatpush1.msra.mxu0 0.0
        %692 = vmatprep.subr.mxu0 0.0
        %693 = vmatpush1.msra.mxu0 0.0
        %694 = vmatprep.subr.mxu0 0.0
        %695 = vmatpush1.msra.mxu0 0.0
        %696 = vmatprep.subr.mxu0 0.0
        %697 = vmatpush1.msra.mxu0 0.0
        %698 = vmatprep.subr.mxu0 0.0
        %699 = vmatpush1.msra.mxu0 0.0
        %700 = vmatprep.mubr.f32.mxu0 0.0
        %701 = vmatmul.mubr.f32.gmra.mrb[0].mxu0 %v400
        %v702 = vpop.f32.mrb[0].mxu0
        %v703 = vadd.f32 0.0, %v702
        %v704 = vpop.f32.mrb[0].mxu0
        %v705 = vadd.f32 0.0, %v704
        %706 = vmatprep.mubr.f32.mxu0 0.0
        %707 = vmatmul.mubr.f32.gmra.mrb[0].mxu0 %v403
        %v708 = vpop.f32.mrb[0].mxu0
        %v709 = vadd.f32 0.0, %v708
        %v710 = vpop.f32.mrb[0].mxu0
        %v711 = vadd.f32 0.0, %v710
        %712 = vdwg.mxu0
        %713 = vmatprep.subr.mxu0 %v375
        %714 = vmatpush1.msra.mxu0 %v374
        %715 = vmatprep.subr.mxu0 %v391
        %716 = vmatpush1.msra.mxu0 %v390
        %717 = vmatprep.subr.mxu0 0.0
        %718 = vmatpush1.msra.mxu0 0.0
        %719 = vmatprep.subr.mxu0 0.0
        %720 = vmatpush1.msra.mxu0 0.0
        %721 = vmatprep.subr.mxu0 0.0
        %722 = vmatpush1.msra.mxu0 0.0
        %723 = vmatprep.subr.mxu0 0.0
        %724 = vmatpush1.msra.mxu0 0.0
        %725 = vmatprep.subr.mxu0 0.0
        %726 = vmatpush1.msra.mxu0 0.0
        %727 = vmatprep.subr.mxu0 0.0
        %728 = vmatpush1.msra.mxu0 0.0
        %729 = vmatprep.subr.mxu0 0.0
        %730 = vmatpush1.msra.mxu0 0.0
        %731 = vmatprep.subr.mxu0 0.0
        %732 = vmatpush1.msra.mxu0 0.0
        %733 = vmatprep.subr.mxu0 0.0
        %734 = vmatpush1.msra.mxu0 0.0
        %735 = vmatprep.subr.mxu0 0.0
        %736 = vmatpush1.msra.mxu0 0.0
        %737 = vmatprep.subr.mxu0 0.0
        %738 = vmatpush1.msra.mxu0 0.0
        %739 = vmatprep.subr.mxu0 0.0
        %740 = vmatpush1.msra.mxu0 0.0
        %741 = vmatprep.subr.mxu0 0.0
        %742 = vmatpush1.msra.mxu0 0.0
        %743 = vmatprep.subr.mxu0 0.0
        %744 = vmatpush1.msra.mxu0 0.0
        %745 = vmatprep.subr.mxu0 0.0
        %746 = vmatpush1.msra.mxu0 0.0
        %747 = vmatprep.subr.mxu0 0.0
        %748 = vmatpush1.msra.mxu0 0.0
        %749 = vmatprep.subr.mxu0 0.0
        %750 = vmatpush1.msra.mxu0 0.0
        %751 = vmatprep.subr.mxu0 0.0
        %752 = vmatpush1.msra.mxu0 0.0
        %753 = vmatprep.subr.mxu0 0.0
        %754 = vmatpush1.msra.mxu0 0.0
        %755 = vmatprep.subr.mxu0 0.0
        %756 = vmatpush1.msra.mxu0 0.0
        %757 = vmatprep.subr.mxu0 0.0
        %758 = vmatpush1.msra.mxu0 0.0
        %759 = vmatprep.subr.mxu0 0.0
        %760 = vmatpush1.msra.mxu0 0.0
        %761 = vmatprep.subr.mxu0 0.0
        %762 = vmatpush1.msra.mxu0 0.0
        %763 = vmatprep.subr.mxu0 0.0
        %764 = vmatpush1.msra.mxu0 0.0
        %765 = vmatprep.subr.mxu0 0.0
        %766 = vmatpush1.msra.mxu0 0.0
        %767 = vmatprep.subr.mxu0 0.0
        %768 = vmatpush1.msra.mxu0 0.0
        %769 = vmatprep.subr.mxu0 0.0
        %770 = vmatpush1.msra.mxu0 0.0
        %771 = vmatprep.subr.mxu0 0.0
        %772 = vmatpush1.msra.mxu0 0.0
        %773 = vmatprep.subr.mxu0 0.0
        %774 = vmatpush1.msra.mxu0 0.0
        %775 = vmatprep.subr.mxu0 0.0
        %776 = vmatpush1.msra.mxu0 0.0
        %777 = vmatprep.mubr.f32.mxu0 0.0
        %778 = vmatmul.mubr.f32.gmra.mrb[0].mxu0 %v400
        %v779 = vpop.f32.mrb[0].mxu0
        %v780 = vadd.f32 0.0, %v779
        %v781 = vpop.f32.mrb[0].mxu0
        %v782 = vadd.f32 0.0, %v781
        %783 = vmatprep.mubr.f32.mxu0 0.0
        %784 = vmatmul.mubr.f32.gmra.mrb[0].mxu0 %v403
        %v785 = vpop.f32.mrb[0].mxu0
        %v786 = vadd.f32 0.0, %v785
        %v787 = vpop.f32.mrb[0].mxu0
        %v788 = vadd.f32 0.0, %v787
        %789 = vdwg.mxu0
        %790 = vmatprep.subr.mxu0 %v377
        %791 = vmatpush1.msra.mxu0 %v376
        %792 = vmatprep.subr.mxu0 %v393
        %793 = vmatpush1.msra.mxu0 %v392
        %794 = vmatprep.subr.mxu0 0.0
        %795 = vmatpush1.msra.mxu0 0.0
        %796 = vmatprep.subr.mxu0 0.0
        %797 = vmatpush1.msra.mxu0 0.0
        %798 = vmatprep.subr.mxu0 0.0
        %799 = vmatpush1.msra.mxu0 0.0
        %800 = vmatprep.subr.mxu0 0.0
        %801 = vmatpush1.msra.mxu0 0.0
        %802 = vmatprep.subr.mxu0 0.0
        %803 = vmatpush1.msra.mxu0 0.0
        %804 = vmatprep.subr.mxu0 0.0
        %805 = vmatpush1.msra.mxu0 0.0
        %806 = vmatprep.subr.mxu0 0.0
        %807 = vmatpush1.msra.mxu0 0.0
        %808 = vmatprep.subr.mxu0 0.0
        %809 = vmatpush1.msra.mxu0 0.0
        %810 = vmatprep.subr.mxu0 0.0
        %811 = vmatpush1.msra.mxu0 0.0
        %812 = vmatprep.subr.mxu0 0.0
        %813 = vmatpush1.msra.mxu0 0.0
        %814 = vmatprep.subr.mxu0 0.0
        %815 = vmatpush1.msra.mxu0 0.0
        %816 = vmatprep.subr.mxu0 0.0
        %817 = vmatpush1.msra.mxu0 0.0
        %818 = vmatprep.subr.mxu0 0.0
        %819 = vmatpush1.msra.mxu0 0.0
        %820 = vmatprep.subr.mxu0 0.0
        %821 = vmatpush1.msra.mxu0 0.0
        %822 = vmatprep.subr.mxu0 0.0
        %823 = vmatpush1.msra.mxu0 0.0
        %824 = vmatprep.subr.mxu0 0.0
        %825 = vmatpush1.msra.mxu0 0.0
        %826 = vmatprep.subr.mxu0 0.0
        %827 = vmatpush1.msra.mxu0 0.0
        %828 = vmatprep.subr.mxu0 0.0
        %829 = vmatpush1.msra.mxu0 0.0
        %830 = vmatprep.subr.mxu0 0.0
        %831 = vmatpush1.msra.mxu0 0.0
        %832 = vmatprep.subr.mxu0 0.0
        %833 = vmatpush1.msra.mxu0 0.0
        %834 = vmatprep.subr.mxu0 0.0
        %835 = vmatpush1.msra.mxu0 0.0
        %836 = vmatprep.subr.mxu0 0.0
        %837 = vmatpush1.msra.mxu0 0.0
        %838 = vmatprep.subr.mxu0 0.0
        %839 = vmatpush1.msra.mxu0 0.0
        %840 = vmatprep.subr.mxu0 0.0
        %841 = vmatpush1.msra.mxu0 0.0
        %842 = vmatprep.subr.mxu0 0.0
        %843 = vmatpush1.msra.mxu0 0.0
        %844 = vmatprep.subr.mxu0 0.0
        %845 = vmatpush1.msra.mxu0 0.0
        %846 = vmatprep.subr.mxu0 0.0
        %847 = vmatpush1.msra.mxu0 0.0
        %848 = vmatprep.subr.mxu0 0.0
        %849 = vmatpush1.msra.mxu0 0.0
        %850 = vmatprep.subr.mxu0 0.0
        %851 = vmatpush1.msra.mxu0 0.0
        %852 = vmatprep.subr.mxu0 0.0
        %853 = vmatpush1.msra.mxu0 0.0
        %854 = vmatprep.mubr.f32.mxu0 0.0
        %855 = vmatmul.mubr.f32.gmra.mrb[0].mxu0 %v400
        %v856 = vpop.f32.mrb[0].mxu0
        %v857 = vadd.f32 0.0, %v856
        %v858 = vpop.f32.mrb[0].mxu0
        %v859 = vadd.f32 0.0, %v858
        %860 = vmatprep.mubr.f32.mxu0 0.0
        %861 = vmatmul.mubr.f32.gmra.mrb[0].mxu0 %v403
        %v862 = vpop.f32.mrb[0].mxu0
        %v863 = vadd.f32 0.0, %v862
        %v864 = vpop.f32.mrb[0].mxu0
        %v865 = vadd.f32 0.0, %v864
        %866 = vdwg.mxu0
        %867 = vmatprep.subr.mxu0 %v379
        %868 = vmatpush1.msra.mxu0 %v378
        %869 = vmatprep.subr.mxu0 %v395
        %870 = vmatpush1.msra.mxu0 %v394
        %871 = vmatprep.subr.mxu0 0.0
        %872 = vmatpush1.msra.mxu0 0.0
        %873 = vmatprep.subr.mxu0 0.0
        %874 = vmatpush1.msra.mxu0 0.0
        %875 = vmatprep.subr.mxu0 0.0
        %876 = vmatpush1.msra.mxu0 0.0
        %877 = vmatprep.subr.mxu0 0.0
        %878 = vmatpush1.msra.mxu0 0.0
        %879 = vmatprep.subr.mxu0 0.0
        %880 = vmatpush1.msra.mxu0 0.0
        %881 = vmatprep.subr.mxu0 0.0
        %882 = vmatpush1.msra.mxu0 0.0
        %883 = vmatprep.subr.mxu0 0.0
        %884 = vmatpush1.msra.mxu0 0.0
        %885 = vmatprep.subr.mxu0 0.0
        %886 = vmatpush1.msra.mxu0 0.0
        %887 = vmatprep.subr.mxu0 0.0
        %888 = vmatpush1.msra.mxu0 0.0
        %889 = vmatprep.subr.mxu0 0.0
        %890 = vmatpush1.msra.mxu0 0.0
        %891 = vmatprep.subr.mxu0 0.0
        %892 = vmatpush1.msra.mxu0 0.0
        %893 = vmatprep.subr.mxu0 0.0
        %894 = vmatpush1.msra.mxu0 0.0
        %895 = vmatprep.subr.mxu0 0.0
        %896 = vmatpush1.msra.mxu0 0.0
        %897 = vmatprep.subr.mxu0 0.0
        %898 = vmatpush1.msra.mxu0 0.0
        %899 = vmatprep.subr.mxu0 0.0
        %900 = vmatpush1.msra.mxu0 0.0
        %901 = vmatprep.subr.mxu0 0.0
        %902 = vmatpush1.msra.mxu0 0.0
        %903 = vmatprep.subr.mxu0 0.0
        %904 = vmatpush1.msra.mxu0 0.0
        %905 = vmatprep.subr.mxu0 0.0
        %906 = vmatpush1.msra.mxu0 0.0
        %907 = vmatprep.subr.mxu0 0.0
        %908 = vmatpush1.msra.mxu0 0.0
        %909 = vmatprep.subr.mxu0 0.0
        %910 = vmatpush1.msra.mxu0 0.0
        %911 = vmatprep.subr.mxu0 0.0
        %912 = vmatpush1.msra.mxu0 0.0
        %913 = vmatprep.subr.mxu0 0.0
        %914 = vmatpush1.msra.mxu0 0.0
        %915 = vmatprep.subr.mxu0 0.0
        %916 = vmatpush1.msra.mxu0 0.0
        %917 = vmatprep.subr.mxu0 0.0
        %918 = vmatpush1.msra.mxu0 0.0
        %919 = vmatprep.subr.mxu0 0.0
        %920 = vmatpush1.msra.mxu0 0.0
        %921 = vmatprep.subr.mxu0 0.0
        %922 = vmatpush1.msra.mxu0 0.0
        %923 = vmatprep.subr.mxu0 0.0
        %924 = vmatpush1.msra.mxu0 0.0
        %925 = vmatprep.subr.mxu0 0.0
        %926 = vmatpush1.msra.mxu0 0.0
        %927 = vmatprep.subr.mxu0 0.0
        %928 = vmatpush1.msra.mxu0 0.0
        %929 = vmatprep.subr.mxu0 0.0
        %930 = vmatpush1.msra.mxu0 0.0
        %931 = vmatprep.mubr.f32.mxu0 0.0
        %932 = vmatmul.mubr.f32.gmra.mrb[0].mxu0 %v400
        %v933 = vpop.f32.mrb[0].mxu0
        %v934 = vadd.f32 0.0, %v933
        %v935 = vpop.f32.mrb[0].mxu0
        %v936 = vadd.f32 0.0, %v935
        %937 = vmatprep.mubr.f32.mxu0 0.0
        %938 = vmatmul.mubr.f32.gmra.mrb[0].mxu0 %v403
        %v939 = vpop.f32.mrb[0].mxu0
        %v940 = vadd.f32 0.0, %v939
        %v941 = vpop.f32.mrb[0].mxu0
        %v942 = vadd.f32 0.0, %v941
        %943 = vdwg.mxu0
        %944 = vmatprep.subr.mxu0 %v381
        %945 = vmatpush1.msra.mxu0 %v380
        %946 = vmatprep.subr.mxu0 %v397
        %947 = vmatpush1.msra.mxu0 %v396
        %948 = vmatprep.subr.mxu0 0.0
        %949 = vmatpush1.msra.mxu0 0.0
        %950 = vmatprep.subr.mxu0 0.0
        %951 = vmatpush1.msra.mxu0 0.0
        %952 = vmatprep.subr.mxu0 0.0
        %953 = vmatpush1.msra.mxu0 0.0
        %954 = vmatprep.subr.mxu0 0.0
        %955 = vmatpush1.msra.mxu0 0.0
        %956 = vmatprep.subr.mxu0 0.0
        %957 = vmatpush1.msra.mxu0 0.0
        %958 = vmatprep.subr.mxu0 0.0
        %959 = vmatpush1.msra.mxu0 0.0
        %960 = vmatprep.subr.mxu0 0.0
        %961 = vmatpush1.msra.mxu0 0.0
        %962 = vmatprep.subr.mxu0 0.0
        %963 = vmatpush1.msra.mxu0 0.0
        %964 = vmatprep.subr.mxu0 0.0
        %965 = vmatpush1.msra.mxu0 0.0
        %966 = vmatprep.subr.mxu0 0.0
        %967 = vmatpush1.msra.mxu0 0.0
        %968 = vmatprep.subr.mxu0 0.0
        %969 = vmatpush1.msra.mxu0 0.0
        %970 = vmatprep.subr.mxu0 0.0
        %971 = vmatpush1.msra.mxu0 0.0
        %972 = vmatprep.subr.mxu0 0.0
        %973 = vmatpush1.msra.mxu0 0.0
        %974 = vmatprep.subr.mxu0 0.0
        %975 = vmatpush1.msra.mxu0 0.0
        %976 = vmatprep.subr.mxu0 0.0
        %977 = vmatpush1.msra.mxu0 0.0
        %978 = vmatprep.subr.mxu0 0.0
        %979 = vmatpush1.msra.mxu0 0.0
        %980 = vmatprep.subr.mxu0 0.0
        %981 = vmatpush1.msra.mxu0 0.0
        %982 = vmatprep.subr.mxu0 0.0
        %983 = vmatpush1.msra.mxu0 0.0
        %984 = vmatprep.subr.mxu0 0.0
        %985 = vmatpush1.msra.mxu0 0.0
        %986 = vmatprep.subr.mxu0 0.0
        %987 = vmatpush1.msra.mxu0 0.0
        %988 = vmatprep.subr.mxu0 0.0
        %989 = vmatpush1.msra.mxu0 0.0
        %990 = vmatprep.subr.mxu0 0.0
        %991 = vmatpush1.msra.mxu0 0.0
        %992 = vmatprep.subr.mxu0 0.0
        %993 = vmatpush1.msra.mxu0 0.0
        %994 = vmatprep.subr.mxu0 0.0
        %995 = vmatpush1.msra.mxu0 0.0
        %996 = vmatprep.subr.mxu0 0.0
        %997 = vmatpush1.msra.mxu0 0.0
        %998 = vmatprep.subr.mxu0 0.0
        %999 = vmatpush1.msra.mxu0 0.0
        %1000 = vmatprep.subr.mxu0 0.0
        %1001 = vmatpush1.msra.mxu0 0.0
        %1002 = vmatprep.subr.mxu0 0.0
        %1003 = vmatpush1.msra.mxu0 0.0
        %1004 = vmatprep.subr.mxu0 0.0
        %1005 = vmatpush1.msra.mxu0 0.0
        %1006 = vmatprep.subr.mxu0 0.0
        %1007 = vmatpush1.msra.mxu0 0.0
        %1008 = vmatprep.mubr.f32.mxu0 0.0
        %1009 = vmatmul.mubr.f32.gmra.mrb[0].mxu0 %v400
        %v1010 = vpop.f32.mrb[0].mxu0
        %v1011 = vadd.f32 0.0, %v1010
        %v1012 = vpop.f32.mrb[0].mxu0
        %v1013 = vadd.f32 0.0, %v1012
        %1014 = vmatprep.mubr.f32.mxu0 0.0
        %1015 = vmatmul.mubr.f32.gmra.mrb[0].mxu0 %v403
        %v1016 = vpop.f32.mrb[0].mxu0
        %v1017 = vadd.f32 0.0, %v1016
        %v1018 = vpop.f32.mrb[0].mxu0
        %v1019 = vadd.f32 0.0, %v1018
        %1020 = vdwg.mxu0
        %v1021 = vld [vmem:[%s363] sm:$0xff]
        %v1022 = vld [vmem:[%s363 + $0x8] sm:$0xff]
        %v1023 = vld [vmem:[%s363 + $0x10] sm:$0xff]
        %v1024 = vld [vmem:[%s363 + $0x18] sm:$0xff]
        %v1025 = vld [vmem:[%s363 + $0x20] sm:$0xff]
        %v1026 = vld [vmem:[%s363 + $0x28] sm:$0xff]
        %v1027 = vld [vmem:[%s363 + $0x30] sm:$0xff]
        %v1028 = vld [vmem:[%s363 + $0x38] sm:$0xff]
        %v1029 = vld [vmem:[%s363 + $0x40] sm:$0xff]
        %v1030 = vld [vmem:[%s363 + $0x48] sm:$0xff]
        %v1031 = vld [vmem:[%s363 + $0x50] sm:$0xff]
        %v1032 = vld [vmem:[%s363 + $0x58] sm:$0xff]
        %v1033 = vld [vmem:[%s363 + $0x60] sm:$0xff]
        %v1034 = vld [vmem:[%s363 + $0x68] sm:$0xff]
        %v1035 = vld [vmem:[%s363 + $0x70] sm:$0xff]
        %v1036 = vld [vmem:[%s363 + $0x78] sm:$0xff]
        %v1037 = vld [vmem:[%s363 + $0x80] sm:$0xff]
        %v1038 = vld [vmem:[%s363 + $0x88] sm:$0xff]
        %v1039 = vld [vmem:[%s363 + $0x90] sm:$0xff]
        %v1040 = vld [vmem:[%s363 + $0x98] sm:$0xff]
        %v1041 = vld [vmem:[%s363 + $0xa0] sm:$0xff]
        %v1042 = vld [vmem:[%s363 + $0xa8] sm:$0xff]
        %v1043 = vld [vmem:[%s363 + $0xb0] sm:$0xff]
        %v1044 = vld [vmem:[%s363 + $0xb8] sm:$0xff]
        %v1045 = vld [vmem:[%s363 + $0xc0] sm:$0xff]
        %v1046 = vld [vmem:[%s363 + $0xc8] sm:$0xff]
        %v1047 = vld [vmem:[%s363 + $0xd0] sm:$0xff]
        %v1048 = vld [vmem:[%s363 + $0xd8] sm:$0xff]
        %v1049 = vld [vmem:[%s363 + $0xe0] sm:$0xff]
        %v1050 = vld [vmem:[%s363 + $0xe8] sm:$0xff]
        %v1051 = vld [vmem:[%s363 + $0xf0] sm:$0xff]
        %v1052 = vld [vmem:[%s363 + $0xf8] sm:$0xff]
        %v1053 = vld [vmem:[%s363 + $0x100] sm:$0xff]
        %v1054 = vld [vmem:[%s363 + $0x108] sm:$0xff]
        %v1055 = vld [vmem:[%s363 + $0x110] sm:$0xff]
        %v1056 = vld [vmem:[%s363 + $0x118] sm:$0xff]
        %v1057 = vld [vmem:[%s363 + $0x120] sm:$0xff]
        %v1058 = vld [vmem:[%s363 + $0x128] sm:$0xff]
        %v1059 = vld [vmem:[%s363 + $0x130] sm:$0xff]
        %v1060 = vld [vmem:[%s363 + $0x138] sm:$0xff]
        %v1061 = vld [vmem:[%s363 + $0x140] sm:$0xff]
        %v1062 = vld [vmem:[%s363 + $0x148] sm:$0xff]
        %v1063 = vld [vmem:[%s363 + $0x150] sm:$0xff]
        %v1064 = vld [vmem:[%s363 + $0x158] sm:$0xff]
        %v1065 = vld [vmem:[%s363 + $0x160] sm:$0xff]
        %v1066 = vld [vmem:[%s363 + $0x168] sm:$0xff]
        %v1067 = vld [vmem:[%s363 + $0x170] sm:$0xff]
        %v1068 = vld [vmem:[%s363 + $0x178] sm:$0xff]
        %v1069 = vld [vmem:[%s363 + $0x180] sm:$0xff]
        %v1070 = vld [vmem:[%s363 + $0x188] sm:$0xff]
        %v1071 = vld [vmem:[%s363 + $0x190] sm:$0xff]
        %v1072 = vld [vmem:[%s363 + $0x198] sm:$0xff]
        %v1073 = vld [vmem:[%s363 + $0x1a0] sm:$0xff]
        %v1074 = vld [vmem:[%s363 + $0x1a8] sm:$0xff]
        %v1075 = vld [vmem:[%s363 + $0x1b0] sm:$0xff]
        %v1076 = vld [vmem:[%s363 + $0x1b8] sm:$0xff]
        %v1077 = vld [vmem:[%s363 + $0x1c0] sm:$0xff]
        %v1078 = vld [vmem:[%s363 + $0x1c8] sm:$0xff]
        %v1079 = vld [vmem:[%s363 + $0x1d0] sm:$0xff]
        %v1080 = vld [vmem:[%s363 + $0x1d8] sm:$0xff]
        %v1081 = vld [vmem:[%s363 + $0x1e0] sm:$0xff]
        %v1082 = vld [vmem:[%s363 + $0x1e8] sm:$0xff]
        %v1083 = vld [vmem:[%s363 + $0x1f0] sm:$0xff]
        %v1084 = vld [vmem:[%s363 + $0x1f8] sm:$0xff]
        %v1085 = vld [vmem:[%s363 + $0x200] sm:$0xff]
        %v1086 = vld [vmem:[%s363 + $0x208] sm:$0xff]
        %v1087 = vld [vmem:[%s363 + $0x210] sm:$0xff]
        %v1088 = vld [vmem:[%s363 + $0x218] sm:$0xff]
        %v1089 = vld [vmem:[%s363 + $0x220] sm:$0xff]
        %v1090 = vld [vmem:[%s363 + $0x228] sm:$0xff]
        %v1091 = vld [vmem:[%s363 + $0x230] sm:$0xff]
        %v1092 = vld [vmem:[%s363 + $0x238] sm:$0xff]
        %v1093 = vld [vmem:[%s363 + $0x240] sm:$0xff]
        %v1094 = vld [vmem:[%s363 + $0x248] sm:$0xff]
        %v1095 = vld [vmem:[%s363 + $0x250] sm:$0xff]
        %v1096 = vld [vmem:[%s363 + $0x258] sm:$0xff]
        %v1097 = vld [vmem:[%s363 + $0x260] sm:$0xff]
        %v1098 = vld [vmem:[%s363 + $0x268] sm:$0xff]
        %v1099 = vld [vmem:[%s363 + $0x270] sm:$0xff]
        %v1100 = vld [vmem:[%s363 + $0x278] sm:$0xff]
        %v1101 = vld [vmem:[%s363 + $0x280] sm:$0xff]
        %v1102 = vld [vmem:[%s363 + $0x288] sm:$0xff]
        %v1103 = vld [vmem:[%s363 + $0x290] sm:$0xff]
        %v1104 = vld [vmem:[%s363 + $0x298] sm:$0xff]
        %v1105 = vld [vmem:[%s363 + $0x2a0] sm:$0xff]
        %v1106 = vld [vmem:[%s363 + $0x2a8] sm:$0xff]
        %v1107 = vld [vmem:[%s363 + $0x2b0] sm:$0xff]
        %v1108 = vld [vmem:[%s363 + $0x2b8] sm:$0xff]
        %v1109 = vld [vmem:[%s363 + $0x2c0] sm:$0xff]
        %v1110 = vld [vmem:[%s363 + $0x2c8] sm:$0xff]
        %v1111 = vld [vmem:[%s363 + $0x2d0] sm:$0xff]
        %v1112 = vld [vmem:[%s363 + $0x2d8] sm:$0xff]
        %v1113 = vld [vmem:[%s363 + $0x2e0] sm:$0xff]
        %v1114 = vld [vmem:[%s363 + $0x2e8] sm:$0xff]
        %v1115 = vld [vmem:[%s363 + $0x2f0] sm:$0xff]
        %v1116 = vld [vmem:[%s363 + $0x2f8] sm:$0xff]
        %v1117 = vld [vmem:[%s363 + $0x300] sm:$0xff]
        %v1118 = vld [vmem:[%s363 + $0x308] sm:$0xff]
        %v1119 = vld [vmem:[%s363 + $0x310] sm:$0xff]
        %v1120 = vld [vmem:[%s363 + $0x318] sm:$0xff]
        %v1121 = vld [vmem:[%s363 + $0x320] sm:$0xff]
        %v1122 = vld [vmem:[%s363 + $0x328] sm:$0xff]
        %v1123 = vld [vmem:[%s363 + $0x330] sm:$0xff]
        %v1124 = vld [vmem:[%s363 + $0x338] sm:$0xff]
        %v1125 = vld [vmem:[%s363 + $0x340] sm:$0xff]
        %v1126 = vld [vmem:[%s363 + $0x348] sm:$0xff]
        %v1127 = vld [vmem:[%s363 + $0x350] sm:$0xff]
        %v1128 = vld [vmem:[%s363 + $0x358] sm:$0xff]
        %v1129 = vld [vmem:[%s363 + $0x360] sm:$0xff]
        %v1130 = vld [vmem:[%s363 + $0x368] sm:$0xff]
        %v1131 = vld [vmem:[%s363 + $0x370] sm:$0xff]
        %v1132 = vld [vmem:[%s363 + $0x378] sm:$0xff]
        %v1133 = vld [vmem:[%s363 + $0x380] sm:$0xff]
        %v1134 = vld [vmem:[%s363 + $0x388] sm:$0xff]
        %v1135 = vld [vmem:[%s363 + $0x390] sm:$0xff]
        %v1136 = vld [vmem:[%s363 + $0x398] sm:$0xff]
        %v1137 = vld [vmem:[%s363 + $0x3a0] sm:$0xff]
        %v1138 = vld [vmem:[%s363 + $0x3a8] sm:$0xff]
        %v1139 = vld [vmem:[%s363 + $0x3b0] sm:$0xff]
        %v1140 = vld [vmem:[%s363 + $0x3b8] sm:$0xff]
        %v1141 = vld [vmem:[%s363 + $0x3c0] sm:$0xff]
        %v1142 = vld [vmem:[%s363 + $0x3c8] sm:$0xff]
        %v1143 = vld [vmem:[%s363 + $0x3d0] sm:$0xff]
        %v1144 = vld [vmem:[%s363 + $0x3d8] sm:$0xff]
        %v1145 = vld [vmem:[%s363 + $0x3e0] sm:$0xff]
        %v1146 = vld [vmem:[%s363 + $0x3e8] sm:$0xff]
        %v1147 = vld [vmem:[%s363 + $0x3f0] sm:$0xff]
        %v1148 = vld [vmem:[%s363 + $0x3f8] sm:$0xff]
        %v1149 = vld [vmem:[%s363 + $0x400] sm:$0xff]
        %v1150 = vld [vmem:[%s363 + $0x408] sm:$0xff]
        %v1151 = vld [vmem:[%s363 + $0x410] sm:$0xff]
        %v1152 = vld [vmem:[%s363 + $0x418] sm:$0xff]
        %v1153 = vld [vmem:[%s363 + $0x420] sm:$0xff]
        %v1154 = vld [vmem:[%s363 + $0x428] sm:$0xff]
        %v1155 = vld [vmem:[%s363 + $0x430] sm:$0xff]
        %v1156 = vld [vmem:[%s363 + $0x438] sm:$0xff]
        %v1157 = vld [vmem:[%s363 + $0x440] sm:$0xff]
        %v1158 = vld [vmem:[%s363 + $0x448] sm:$0xff]
        %v1159 = vld [vmem:[%s363 + $0x450] sm:$0xff]
        %v1160 = vld [vmem:[%s363 + $0x458] sm:$0xff]
        %v1161 = vld [vmem:[%s363 + $0x460] sm:$0xff]
        %v1162 = vld [vmem:[%s363 + $0x468] sm:$0xff]
        %v1163 = vld [vmem:[%s363 + $0x470] sm:$0xff]
        %v1164 = vld [vmem:[%s363 + $0x478] sm:$0xff]
        %v1165 = vld [vmem:[%s363 + $0x480] sm:$0xff]
        %v1166 = vld [vmem:[%s363 + $0x488] sm:$0xff]
        %v1167 = vld [vmem:[%s363 + $0x490] sm:$0xff]
        %v1168 = vld [vmem:[%s363 + $0x498] sm:$0xff]
        %v1169 = vld [vmem:[%s363 + $0x4a0] sm:$0xff]
        %v1170 = vld [vmem:[%s363 + $0x4a8] sm:$0xff]
        %v1171 = vld [vmem:[%s363 + $0x4b0] sm:$0xff]
        %v1172 = vld [vmem:[%s363 + $0x4b8] sm:$0xff]
        %v1173 = vld [vmem:[%s363 + $0x4c0] sm:$0xff]
        %v1174 = vld [vmem:[%s363 + $0x4c8] sm:$0xff]
        %v1175 = vld [vmem:[%s363 + $0x4d0] sm:$0xff]
        %v1176 = vld [vmem:[%s363 + $0x4d8] sm:$0xff]
        %v1177 = vld [vmem:[%s363 + $0x4e0] sm:$0xff]
        %v1178 = vld [vmem:[%s363 + $0x4e8] sm:$0xff]
        %v1179 = vld [vmem:[%s363 + $0x4f0] sm:$0xff]
        %v1180 = vld [vmem:[%s363 + $0x4f8] sm:$0xff]
        %v1181 = vld [vmem:[%s363 + $0x500] sm:$0xff]
        %v1182 = vld [vmem:[%s363 + $0x508] sm:$0xff]
        %v1183 = vld [vmem:[%s363 + $0x510] sm:$0xff]
        %v1184 = vld [vmem:[%s363 + $0x518] sm:$0xff]
        %v1185 = vld [vmem:[%s363 + $0x520] sm:$0xff]
        %v1186 = vld [vmem:[%s363 + $0x528] sm:$0xff]
        %v1187 = vld [vmem:[%s363 + $0x530] sm:$0xff]
        %v1188 = vld [vmem:[%s363 + $0x538] sm:$0xff]
        %v1189 = vld [vmem:[%s363 + $0x540] sm:$0xff]
        %v1190 = vld [vmem:[%s363 + $0x548] sm:$0xff]
        %v1191 = vld [vmem:[%s363 + $0x550] sm:$0xff]
        %v1192 = vld [vmem:[%s363 + $0x558] sm:$0xff]
        %v1193 = vld [vmem:[%s363 + $0x560] sm:$0xff]
        %v1194 = vld [vmem:[%s363 + $0x568] sm:$0xff]
        %v1195 = vld [vmem:[%s363 + $0x570] sm:$0xff]
        %v1196 = vld [vmem:[%s363 + $0x578] sm:$0xff]
        %v1197 = vld [vmem:[%s363 + $0x580] sm:$0xff]
        %v1198 = vld [vmem:[%s363 + $0x588] sm:$0xff]
        %v1199 = vld [vmem:[%s363 + $0x590] sm:$0xff]
        %v1200 = vld [vmem:[%s363 + $0x598] sm:$0xff]
        %v1201 = vld [vmem:[%s363 + $0x5a0] sm:$0xff]
        %v1202 = vld [vmem:[%s363 + $0x5a8] sm:$0xff]
        %v1203 = vld [vmem:[%s363 + $0x5b0] sm:$0xff]
        %v1204 = vld [vmem:[%s363 + $0x5b8] sm:$0xff]
        %v1205 = vld [vmem:[%s363 + $0x5c0] sm:$0xff]
        %v1206 = vld [vmem:[%s363 + $0x5c8] sm:$0xff]
        %v1207 = vld [vmem:[%s363 + $0x5d0] sm:$0xff]
        %v1208 = vld [vmem:[%s363 + $0x5d8] sm:$0xff]
        %v1209 = vld [vmem:[%s363 + $0x5e0] sm:$0xff]
        %v1210 = vld [vmem:[%s363 + $0x5e8] sm:$0xff]
        %v1211 = vld [vmem:[%s363 + $0x5f0] sm:$0xff]
        %v1212 = vld [vmem:[%s363 + $0x5f8] sm:$0xff]
        %v1213 = vld [vmem:[%s363 + $0x600] sm:$0xff]
        %v1214 = vld [vmem:[%s363 + $0x608] sm:$0xff]
        %v1215 = vld [vmem:[%s363 + $0x610] sm:$0xff]
        %v1216 = vld [vmem:[%s363 + $0x618] sm:$0xff]
        %v1217 = vld [vmem:[%s363 + $0x620] sm:$0xff]
        %v1218 = vld [vmem:[%s363 + $0x628] sm:$0xff]
        %v1219 = vld [vmem:[%s363 + $0x630] sm:$0xff]
        %v1220 = vld [vmem:[%s363 + $0x638] sm:$0xff]
        %v1221 = vld [vmem:[%s363 + $0x640] sm:$0xff]
        %v1222 = vld [vmem:[%s363 + $0x648] sm:$0xff]
        %v1223 = vld [vmem:[%s363 + $0x650] sm:$0xff]
        %v1224 = vld [vmem:[%s363 + $0x658] sm:$0xff]
        %v1225 = vld [vmem:[%s363 + $0x660] sm:$0xff]
        %v1226 = vld [vmem:[%s363 + $0x668] sm:$0xff]
        %v1227 = vld [vmem:[%s363 + $0x670] sm:$0xff]
        %v1228 = vld [vmem:[%s363 + $0x678] sm:$0xff]
        %v1229 = vld [vmem:[%s363 + $0x680] sm:$0xff]
        %v1230 = vld [vmem:[%s363 + $0x688] sm:$0xff]
        %v1231 = vld [vmem:[%s363 + $0x690] sm:$0xff]
        %v1232 = vld [vmem:[%s363 + $0x698] sm:$0xff]
        %v1233 = vld [vmem:[%s363 + $0x6a0] sm:$0xff]
        %v1234 = vld [vmem:[%s363 + $0x6a8] sm:$0xff]
        %v1235 = vld [vmem:[%s363 + $0x6b0] sm:$0xff]
        %v1236 = vld [vmem:[%s363 + $0x6b8] sm:$0xff]
        %v1237 = vld [vmem:[%s363 + $0x6c0] sm:$0xff]
        %v1238 = vld [vmem:[%s363 + $0x6c8] sm:$0xff]
        %v1239 = vld [vmem:[%s363 + $0x6d0] sm:$0xff]
        %v1240 = vld [vmem:[%s363 + $0x6d8] sm:$0xff]
        %v1241 = vld [vmem:[%s363 + $0x6e0] sm:$0xff]
        %v1242 = vld [vmem:[%s363 + $0x6e8] sm:$0xff]
        %v1243 = vld [vmem:[%s363 + $0x6f0] sm:$0xff]
        %v1244 = vld [vmem:[%s363 + $0x6f8] sm:$0xff]
        %v1245 = vld [vmem:[%s363 + $0x700] sm:$0xff]
        %v1246 = vld [vmem:[%s363 + $0x708] sm:$0xff]
        %v1247 = vld [vmem:[%s363 + $0x710] sm:$0xff]
        %v1248 = vld [vmem:[%s363 + $0x718] sm:$0xff]
        %v1249 = vld [vmem:[%s363 + $0x720] sm:$0xff]
        %v1250 = vld [vmem:[%s363 + $0x728] sm:$0xff]
        %v1251 = vld [vmem:[%s363 + $0x730] sm:$0xff]
        %v1252 = vld [vmem:[%s363 + $0x738] sm:$0xff]
        %v1253 = vld [vmem:[%s363 + $0x740] sm:$0xff]
        %v1254 = vld [vmem:[%s363 + $0x748] sm:$0xff]
        %v1255 = vld [vmem:[%s363 + $0x750] sm:$0xff]
        %v1256 = vld [vmem:[%s363 + $0x758] sm:$0xff]
        %v1257 = vld [vmem:[%s363 + $0x760] sm:$0xff]
        %v1258 = vld [vmem:[%s363 + $0x768] sm:$0xff]
        %v1259 = vld [vmem:[%s363 + $0x770] sm:$0xff]
        %v1260 = vld [vmem:[%s363 + $0x778] sm:$0xff]
        %v1261 = vld [vmem:[%s363 + $0x780] sm:$0xff]
        %v1262 = vld [vmem:[%s363 + $0x788] sm:$0xff]
        %v1263 = vld [vmem:[%s363 + $0x790] sm:$0xff]
        %v1264 = vld [vmem:[%s363 + $0x798] sm:$0xff]
        %v1265 = vld [vmem:[%s363 + $0x7a0] sm:$0xff]
        %v1266 = vld [vmem:[%s363 + $0x7a8] sm:$0xff]
        %v1267 = vld [vmem:[%s363 + $0x7b0] sm:$0xff]
        %v1268 = vld [vmem:[%s363 + $0x7b8] sm:$0xff]
        %v1269 = vld [vmem:[%s363 + $0x7c0] sm:$0xff]
        %v1270 = vld [vmem:[%s363 + $0x7c8] sm:$0xff]
        %v1271 = vld [vmem:[%s363 + $0x7d0] sm:$0xff]
        %v1272 = vld [vmem:[%s363 + $0x7d8] sm:$0xff]
        %v1273 = vld [vmem:[%s363 + $0x7e0] sm:$0xff]
        %v1274 = vld [vmem:[%s363 + $0x7e8] sm:$0xff]
        %v1275 = vld [vmem:[%s363 + $0x7f0] sm:$0xff]
        %v1276 = vld [vmem:[%s363 + $0x7f8] sm:$0xff]
        %1277 = vmatprep.subr.mxu0 0.0
        %1278 = vmatpush1.msra.mxu0 %v1021
        %1279 = vmatprep.subr.mxu0 0.0
        %1280 = vmatpush1.msra.mxu0 %v1022
        %1281 = vmatprep.subr.mxu0 0.0
        %1282 = vmatpush1.msra.mxu0 %v1023
        %1283 = vmatprep.subr.mxu0 0.0
        %1284 = vmatpush1.msra.mxu0 %v1024
        %1285 = vmatprep.subr.mxu0 0.0
        %1286 = vmatpush1.msra.mxu0 %v1025
        %1287 = vmatprep.subr.mxu0 0.0
        %1288 = vmatpush1.msra.mxu0 %v1026
        %1289 = vmatprep.subr.mxu0 0.0
        %1290 = vmatpush1.msra.mxu0 %v1027
        %1291 = vmatprep.subr.mxu0 0.0
        %1292 = vmatpush1.msra.mxu0 %v1028
        %1293 = vmatprep.subr.mxu0 0.0
        %1294 = vmatpush1.msra.mxu0 %v1029
        %1295 = vmatprep.subr.mxu0 0.0
        %1296 = vmatpush1.msra.mxu0 %v1030
        %1297 = vmatprep.subr.mxu0 0.0
        %1298 = vmatpush1.msra.mxu0 %v1031
        %1299 = vmatprep.subr.mxu0 0.0
        %1300 = vmatpush1.msra.mxu0 %v1032
        %1301 = vmatprep.subr.mxu0 0.0
        %1302 = vmatpush1.msra.mxu0 %v1033
        %1303 = vmatprep.subr.mxu0 0.0
        %1304 = vmatpush1.msra.mxu0 %v1034
        %1305 = vmatprep.subr.mxu0 0.0
        %1306 = vmatpush1.msra.mxu0 %v1035
        %1307 = vmatprep.subr.mxu0 0.0
        %1308 = vmatpush1.msra.mxu0 %v1036
        %1309 = vmatprep.subr.mxu0 0.0
        %1310 = vmatpush1.msra.mxu0 %v1037
        %1311 = vmatprep.subr.mxu0 0.0
        %1312 = vmatpush1.msra.mxu0 %v1038
        %1313 = vmatprep.subr.mxu0 0.0
        %1314 = vmatpush1.msra.mxu0 %v1039
        %1315 = vmatprep.subr.mxu0 0.0
        %1316 = vmatpush1.msra.mxu0 %v1040
        %1317 = vmatprep.subr.mxu0 0.0
        %1318 = vmatpush1.msra.mxu0 %v1041
        %1319 = vmatprep.subr.mxu0 0.0
        %1320 = vmatpush1.msra.mxu0 %v1042
        %1321 = vmatprep.subr.mxu0 0.0
        %1322 = vmatpush1.msra.mxu0 %v1043
        %1323 = vmatprep.subr.mxu0 0.0
        %1324 = vmatpush1.msra.mxu0 %v1044
        %1325 = vmatprep.subr.mxu0 0.0
        %1326 = vmatpush1.msra.mxu0 %v1045
        %1327 = vmatprep.subr.mxu0 0.0
        %1328 = vmatpush1.msra.mxu0 %v1046
        %1329 = vmatprep.subr.mxu0 0.0
        %1330 = vmatpush1.msra.mxu0 %v1047
        %1331 = vmatprep.subr.mxu0 0.0
        %1332 = vmatpush1.msra.mxu0 %v1048
        %1333 = vmatprep.subr.mxu0 0.0
        %1334 = vmatpush1.msra.mxu0 %v1049
        %1335 = vmatprep.subr.mxu0 0.0
        %1336 = vmatpush1.msra.mxu0 %v1050
        %1337 = vmatprep.subr.mxu0 0.0
        %1338 = vmatpush1.msra.mxu0 %v1051
        %1339 = vmatprep.subr.mxu0 0.0
        %1340 = vmatpush1.msra.mxu0 %v1052
        %1341 = vmatprep.mubr.f32.mxu0 %v474
        %1342 = vmatmul.mubr.f32.gmra.mrb[0].mxu0 %v472
        %v1343 = vpop.f32.mrb[0].mxu0
        %v1344 = vadd.f32 0.0, %v1343
        %v1345 = vpop.f32.mrb[0].mxu0
        %1346 = vmatprep.mubr.f32.mxu0 %v480
        %1347 = vmatmul.mubr.f32.gmra.mrb[0].mxu0 %v478
        %v1348 = vpop.f32.mrb[0].mxu0
        %v1349 = vadd.f32 0.0, %v1348
        %v1350 = vpop.f32.mrb[0].mxu0
        %1351 = vdwg.mxu0
        %1352 = vmatprep.subr.mxu0 0.0
        %1353 = vmatpush1.msra.mxu0 %v1053
        %1354 = vmatprep.subr.mxu0 0.0
        %1355 = vmatpush1.msra.mxu0 %v1054
        %1356 = vmatprep.subr.mxu0 0.0
        %1357 = vmatpush1.msra.mxu0 %v1055
        %1358 = vmatprep.subr.mxu0 0.0
        %1359 = vmatpush1.msra.mxu0 %v1056
        %1360 = vmatprep.subr.mxu0 0.0
        %1361 = vmatpush1.msra.mxu0 %v1057
        %1362 = vmatprep.subr.mxu0 0.0
        %1363 = vmatpush1.msra.mxu0 %v1058
        %1364 = vmatprep.subr.mxu0 0.0
        %1365 = vmatpush1.msra.mxu0 %v1059
        %1366 = vmatprep.subr.mxu0 0.0
        %1367 = vmatpush1.msra.mxu0 %v1060
        %1368 = vmatprep.subr.mxu0 0.0
        %1369 = vmatpush1.msra.mxu0 %v1061
        %1370 = vmatprep.subr.mxu0 0.0
        %1371 = vmatpush1.msra.mxu0 %v1062
        %1372 = vmatprep.subr.mxu0 0.0
        %1373 = vmatpush1.msra.mxu0 %v1063
        %1374 = vmatprep.subr.mxu0 0.0
        %1375 = vmatpush1.msra.mxu0 %v1064
        %1376 = vmatprep.subr.mxu0 0.0
        %1377 = vmatpush1.msra.mxu0 %v1065
        %1378 = vmatprep.subr.mxu0 0.0
        %1379 = vmatpush1.msra.mxu0 %v1066
        %1380 = vmatprep.subr.mxu0 0.0
        %1381 = vmatpush1.msra.mxu0 %v1067
        %1382 = vmatprep.subr.mxu0 0.0
        %1383 = vmatpush1.msra.mxu0 %v1068
        %1384 = vmatprep.subr.mxu0 0.0
        %1385 = vmatpush1.msra.mxu0 %v1069
        %1386 = vmatprep.subr.mxu0 0.0
        %1387 = vmatpush1.msra.mxu0 %v1070
        %1388 = vmatprep.subr.mxu0 0.0
        %1389 = vmatpush1.msra.mxu0 %v1071
        %1390 = vmatprep.subr.mxu0 0.0
        %1391 = vmatpush1.msra.mxu0 %v1072
        %1392 = vmatprep.subr.mxu0 0.0
        %1393 = vmatpush1.msra.mxu0 %v1073
        %1394 = vmatprep.subr.mxu0 0.0
        %1395 = vmatpush1.msra.mxu0 %v1074
        %1396 = vmatprep.subr.mxu0 0.0
        %1397 = vmatpush1.msra.mxu0 %v1075
        %1398 = vmatprep.subr.mxu0 0.0
        %1399 = vmatpush1.msra.mxu0 %v1076
        %1400 = vmatprep.subr.mxu0 0.0
        %1401 = vmatpush1.msra.mxu0 %v1077
        %1402 = vmatprep.subr.mxu0 0.0
        %1403 = vmatpush1.msra.mxu0 %v1078
        %1404 = vmatprep.subr.mxu0 0.0
        %1405 = vmatpush1.msra.mxu0 %v1079
        %1406 = vmatprep.subr.mxu0 0.0
        %1407 = vmatpush1.msra.mxu0 %v1080
        %1408 = vmatprep.subr.mxu0 0.0
        %1409 = vmatpush1.msra.mxu0 %v1081
        %1410 = vmatprep.subr.mxu0 0.0
        %1411 = vmatpush1.msra.mxu0 %v1082
        %1412 = vmatprep.subr.mxu0 0.0
        %1413 = vmatpush1.msra.mxu0 %v1083
        %1414 = vmatprep.subr.mxu0 0.0
        %1415 = vmatpush1.msra.mxu0 %v1084
        %1416 = vmatprep.mubr.f32.mxu0 %v551
        %1417 = vmatmul.mubr.f32.gmra.mrb[0].mxu0 %v549
        %v1418 = vpop.f32.mrb[0].mxu0
        %v1419 = vadd.f32 %v1344, %v1418
        %v1420 = vpop.f32.mrb[0].mxu0
        %1421 = vmatprep.mubr.f32.mxu0 %v557
        %1422 = vmatmul.mubr.f32.gmra.mrb[0].mxu0 %v555
        %v1423 = vpop.f32.mrb[0].mxu0
        %v1424 = vadd.f32 %v1349, %v1423
        %v1425 = vpop.f32.mrb[0].mxu0
        %1426 = vdwg.mxu0
        %1427 = vmatprep.subr.mxu0 0.0
        %1428 = vmatpush1.msra.mxu0 %v1085
        %1429 = vmatprep.subr.mxu0 0.0
        %1430 = vmatpush1.msra.mxu0 %v1086
        %1431 = vmatprep.subr.mxu0 0.0
        %1432 = vmatpush1.msra.mxu0 %v1087
        %1433 = vmatprep.subr.mxu0 0.0
        %1434 = vmatpush1.msra.mxu0 %v1088
        %1435 = vmatprep.subr.mxu0 0.0
        %1436 = vmatpush1.msra.mxu0 %v1089
        %1437 = vmatprep.subr.mxu0 0.0
        %1438 = vmatpush1.msra.mxu0 %v1090
        %1439 = vmatprep.subr.mxu0 0.0
        %1440 = vmatpush1.msra.mxu0 %v1091
        %1441 = vmatprep.subr.mxu0 0.0
        %1442 = vmatpush1.msra.mxu0 %v1092
        %1443 = vmatprep.subr.mxu0 0.0
        %1444 = vmatpush1.msra.mxu0 %v1093
        %1445 = vmatprep.subr.mxu0 0.0
        %1446 = vmatpush1.msra.mxu0 %v1094
        %1447 = vmatprep.subr.mxu0 0.0
        %1448 = vmatpush1.msra.mxu0 %v1095
        %1449 = vmatprep.subr.mxu0 0.0
        %1450 = vmatpush1.msra.mxu0 %v1096
        %1451 = vmatprep.subr.mxu0 0.0
        %1452 = vmatpush1.msra.mxu0 %v1097
        %1453 = vmatprep.subr.mxu0 0.0
        %1454 = vmatpush1.msra.mxu0 %v1098
        %1455 = vmatprep.subr.mxu0 0.0
        %1456 = vmatpush1.msra.mxu0 %v1099
        %1457 = vmatprep.subr.mxu0 0.0
        %1458 = vmatpush1.msra.mxu0 %v1100
        %1459 = vmatprep.subr.mxu0 0.0
        %1460 = vmatpush1.msra.mxu0 %v1101
        %1461 = vmatprep.subr.mxu0 0.0
        %1462 = vmatpush1.msra.mxu0 %v1102
        %1463 = vmatprep.subr.mxu0 0.0
        %1464 = vmatpush1.msra.mxu0 %v1103
        %1465 = vmatprep.subr.mxu0 0.0
        %1466 = vmatpush1.msra.mxu0 %v1104
        %1467 = vmatprep.subr.mxu0 0.0
        %1468 = vmatpush1.msra.mxu0 %v1105
        %1469 = vmatprep.subr.mxu0 0.0
        %1470 = vmatpush1.msra.mxu0 %v1106
        %1471 = vmatprep.subr.mxu0 0.0
        %1472 = vmatpush1.msra.mxu0 %v1107
        %1473 = vmatprep.subr.mxu0 0.0
        %1474 = vmatpush1.msra.mxu0 %v1108
        %1475 = vmatprep.subr.mxu0 0.0
        %1476 = vmatpush1.msra.mxu0 %v1109
        %1477 = vmatprep.subr.mxu0 0.0
        %1478 = vmatpush1.msra.mxu0 %v1110
        %1479 = vmatprep.subr.mxu0 0.0
        %1480 = vmatpush1.msra.mxu0 %v1111
        %1481 = vmatprep.subr.mxu0 0.0
        %1482 = vmatpush1.msra.mxu0 %v1112
        %1483 = vmatprep.subr.mxu0 0.0
        %1484 = vmatpush1.msra.mxu0 %v1113
        %1485 = vmatprep.subr.mxu0 0.0
        %1486 = vmatpush1.msra.mxu0 %v1114
        %1487 = vmatprep.subr.mxu0 0.0
        %1488 = vmatpush1.msra.mxu0 %v1115
        %1489 = vmatprep.subr.mxu0 0.0
        %1490 = vmatpush1.msra.mxu0 %v1116
        %1491 = vmatprep.mubr.f32.mxu0 %v628
        %1492 = vmatmul.mubr.f32.gmra.mrb[0].mxu0 %v626
        %v1493 = vpop.f32.mrb[0].mxu0
        %v1494 = vadd.f32 %v1419, %v1493
        %v1495 = vpop.f32.mrb[0].mxu0
        %1496 = vmatprep.mubr.f32.mxu0 %v634
        %1497 = vmatmul.mubr.f32.gmra.mrb[0].mxu0 %v632
        %v1498 = vpop.f32.mrb[0].mxu0
        %v1499 = vadd.f32 %v1424, %v1498
        %v1500 = vpop.f32.mrb[0].mxu0
        %1501 = vdwg.mxu0
        %1502 = vmatprep.subr.mxu0 0.0
        %1503 = vmatpush1.msra.mxu0 %v1117
        %1504 = vmatprep.subr.mxu0 0.0
        %1505 = vmatpush1.msra.mxu0 %v1118
        %1506 = vmatprep.subr.mxu0 0.0
        %1507 = vmatpush1.msra.mxu0 %v1119
        %1508 = vmatprep.subr.mxu0 0.0
        %1509 = vmatpush1.msra.mxu0 %v1120
        %1510 = vmatprep.subr.mxu0 0.0
        %1511 = vmatpush1.msra.mxu0 %v1121
        %1512 = vmatprep.subr.mxu0 0.0
        %1513 = vmatpush1.msra.mxu0 %v1122
        %1514 = vmatprep.subr.mxu0 0.0
        %1515 = vmatpush1.msra.mxu0 %v1123
        %1516 = vmatprep.subr.mxu0 0.0
        %1517 = vmatpush1.msra.mxu0 %v1124
        %1518 = vmatprep.subr.mxu0 0.0
        %1519 = vmatpush1.msra.mxu0 %v1125
        %1520 = vmatprep.subr.mxu0 0.0
        %1521 = vmatpush1.msra.mxu0 %v1126
        %1522 = vmatprep.subr.mxu0 0.0
        %1523 = vmatpush1.msra.mxu0 %v1127
        %1524 = vmatprep.subr.mxu0 0.0
        %1525 = vmatpush1.msra.mxu0 %v1128
        %1526 = vmatprep.subr.mxu0 0.0
        %1527 = vmatpush1.msra.mxu0 %v1129
        %1528 = vmatprep.subr.mxu0 0.0
        %1529 = vmatpush1.msra.mxu0 %v1130
        %1530 = vmatprep.subr.mxu0 0.0
        %1531 = vmatpush1.msra.mxu0 %v1131
        %1532 = vmatprep.subr.mxu0 0.0
        %1533 = vmatpush1.msra.mxu0 %v1132
        %1534 = vmatprep.subr.mxu0 0.0
        %1535 = vmatpush1.msra.mxu0 %v1133
        %1536 = vmatprep.subr.mxu0 0.0
        %1537 = vmatpush1.msra.mxu0 %v1134
        %1538 = vmatprep.subr.mxu0 0.0
        %1539 = vmatpush1.msra.mxu0 %v1135
        %1540 = vmatprep.subr.mxu0 0.0
        %1541 = vmatpush1.msra.mxu0 %v1136
        %1542 = vmatprep.subr.mxu0 0.0
        %1543 = vmatpush1.msra.mxu0 %v1137
        %1544 = vmatprep.subr.mxu0 0.0
        %1545 = vmatpush1.msra.mxu0 %v1138
        %1546 = vmatprep.subr.mxu0 0.0
        %1547 = vmatpush1.msra.mxu0 %v1139
        %1548 = vmatprep.subr.mxu0 0.0
        %1549 = vmatpush1.msra.mxu0 %v1140
        %1550 = vmatprep.subr.mxu0 0.0
        %1551 = vmatpush1.msra.mxu0 %v1141
        %1552 = vmatprep.subr.mxu0 0.0
        %1553 = vmatpush1.msra.mxu0 %v1142
        %1554 = vmatprep.subr.mxu0 0.0
        %1555 = vmatpush1.msra.mxu0 %v1143
        %1556 = vmatprep.subr.mxu0 0.0
        %1557 = vmatpush1.msra.mxu0 %v1144
        %1558 = vmatprep.subr.mxu0 0.0
        %1559 = vmatpush1.msra.mxu0 %v1145
        %1560 = vmatprep.subr.mxu0 0.0
        %1561 = vmatpush1.msra.mxu0 %v1146
        %1562 = vmatprep.subr.mxu0 0.0
        %1563 = vmatpush1.msra.mxu0 %v1147
        %1564 = vmatprep.subr.mxu0 0.0
        %1565 = vmatpush1.msra.mxu0 %v1148
        %1566 = vmatprep.mubr.f32.mxu0 %v705
        %1567 = vmatmul.mubr.f32.gmra.mrb[0].mxu0 %v703
        %v1568 = vpop.f32.mrb[0].mxu0
        %v1569 = vadd.f32 %v1494, %v1568
        %v1570 = vpop.f32.mrb[0].mxu0
        %1571 = vmatprep.mubr.f32.mxu0 %v711
        %1572 = vmatmul.mubr.f32.gmra.mrb[0].mxu0 %v709
        %v1573 = vpop.f32.mrb[0].mxu0
        %v1574 = vadd.f32 %v1499, %v1573
        %v1575 = vpop.f32.mrb[0].mxu0
        %1576 = vdwg.mxu0
        %1577 = vmatprep.subr.mxu0 0.0
        %1578 = vmatpush1.msra.mxu0 %v1149
        %1579 = vmatprep.subr.mxu0 0.0
        %1580 = vmatpush1.msra.mxu0 %v1150
        %1581 = vmatprep.subr.mxu0 0.0
        %1582 = vmatpush1.msra.mxu0 %v1151
        %1583 = vmatprep.subr.mxu0 0.0
        %1584 = vmatpush1.msra.mxu0 %v1152
        %1585 = vmatprep.subr.mxu0 0.0
        %1586 = vmatpush1.msra.mxu0 %v1153
        %1587 = vmatprep.subr.mxu0 0.0
        %1588 = vmatpush1.msra.mxu0 %v1154
        %1589 = vmatprep.subr.mxu0 0.0
        %1590 = vmatpush1.msra.mxu0 %v1155
        %1591 = vmatprep.subr.mxu0 0.0
        %1592 = vmatpush1.msra.mxu0 %v1156
        %1593 = vmatprep.subr.mxu0 0.0
        %1594 = vmatpush1.msra.mxu0 %v1157
        %1595 = vmatprep.subr.mxu0 0.0
        %1596 = vmatpush1.msra.mxu0 %v1158
        %1597 = vmatprep.subr.mxu0 0.0
        %1598 = vmatpush1.msra.mxu0 %v1159
        %1599 = vmatprep.subr.mxu0 0.0
        %1600 = vmatpush1.msra.mxu0 %v1160
        %1601 = vmatprep.subr.mxu0 0.0
        %1602 = vmatpush1.msra.mxu0 %v1161
        %1603 = vmatprep.subr.mxu0 0.0
        %1604 = vmatpush1.msra.mxu0 %v1162
        %1605 = vmatprep.subr.mxu0 0.0
        %1606 = vmatpush1.msra.mxu0 %v1163
        %1607 = vmatprep.subr.mxu0 0.0
        %1608 = vmatpush1.msra.mxu0 %v1164
        %1609 = vmatprep.subr.mxu0 0.0
        %1610 = vmatpush1.msra.mxu0 %v1165
        %1611 = vmatprep.subr.mxu0 0.0
        %1612 = vmatpush1.msra.mxu0 %v1166
        %1613 = vmatprep.subr.mxu0 0.0
        %1614 = vmatpush1.msra.mxu0 %v1167
        %1615 = vmatprep.subr.mxu0 0.0
        %1616 = vmatpush1.msra.mxu0 %v1168
        %1617 = vmatprep.subr.mxu0 0.0
        %1618 = vmatpush1.msra.mxu0 %v1169
        %1619 = vmatprep.subr.mxu0 0.0
        %1620 = vmatpush1.msra.mxu0 %v1170
        %1621 = vmatprep.subr.mxu0 0.0
        %1622 = vmatpush1.msra.mxu0 %v1171
        %1623 = vmatprep.subr.mxu0 0.0
        %1624 = vmatpush1.msra.mxu0 %v1172
        %1625 = vmatprep.subr.mxu0 0.0
        %1626 = vmatpush1.msra.mxu0 %v1173
        %1627 = vmatprep.subr.mxu0 0.0
        %1628 = vmatpush1.msra.mxu0 %v1174
        %1629 = vmatprep.subr.mxu0 0.0
        %1630 = vmatpush1.msra.mxu0 %v1175
        %1631 = vmatprep.subr.mxu0 0.0
        %1632 = vmatpush1.msra.mxu0 %v1176
        %1633 = vmatprep.subr.mxu0 0.0
        %1634 = vmatpush1.msra.mxu0 %v1177
        %1635 = vmatprep.subr.mxu0 0.0
        %1636 = vmatpush1.msra.mxu0 %v1178
        %1637 = vmatprep.subr.mxu0 0.0
        %1638 = vmatpush1.msra.mxu0 %v1179
        %1639 = vmatprep.subr.mxu0 0.0
        %1640 = vmatpush1.msra.mxu0 %v1180
        %1641 = vmatprep.mubr.f32.mxu0 %v782
        %1642 = vmatmul.mubr.f32.gmra.mrb[0].mxu0 %v780
        %v1643 = vpop.f32.mrb[0].mxu0
        %v1644 = vadd.f32 %v1569, %v1643
        %v1645 = vpop.f32.mrb[0].mxu0
        %1646 = vmatprep.mubr.f32.mxu0 %v788
        %1647 = vmatmul.mubr.f32.gmra.mrb[0].mxu0 %v786
        %v1648 = vpop.f32.mrb[0].mxu0
        %v1649 = vadd.f32 %v1574, %v1648
        %v1650 = vpop.f32.mrb[0].mxu0
        %1651 = vdwg.mxu0
        %1652 = vmatprep.subr.mxu0 0.0
        %1653 = vmatpush1.msra.mxu0 %v1181
        %1654 = vmatprep.subr.mxu0 0.0
        %1655 = vmatpush1.msra.mxu0 %v1182
        %1656 = vmatprep.subr.mxu0 0.0
        %1657 = vmatpush1.msra.mxu0 %v1183
        %1658 = vmatprep.subr.mxu0 0.0
        %1659 = vmatpush1.msra.mxu0 %v1184
        %1660 = vmatprep.subr.mxu0 0.0
        %1661 = vmatpush1.msra.mxu0 %v1185
        %1662 = vmatprep.subr.mxu0 0.0
        %1663 = vmatpush1.msra.mxu0 %v1186
        %1664 = vmatprep.subr.mxu0 0.0
        %1665 = vmatpush1.msra.mxu0 %v1187
        %1666 = vmatprep.subr.mxu0 0.0
        %1667 = vmatpush1.msra.mxu0 %v1188
        %1668 = vmatprep.subr.mxu0 0.0
        %1669 = vmatpush1.msra.mxu0 %v1189
        %1670 = vmatprep.subr.mxu0 0.0
        %1671 = vmatpush1.msra.mxu0 %v1190
        %1672 = vmatprep.subr.mxu0 0.0
        %1673 = vmatpush1.msra.mxu0 %v1191
        %1674 = vmatprep.subr.mxu0 0.0
        %1675 = vmatpush1.msra.mxu0 %v1192
        %1676 = vmatprep.subr.mxu0 0.0
        %1677 = vmatpush1.msra.mxu0 %v1193
        %1678 = vmatprep.subr.mxu0 0.0
        %1679 = vmatpush1.msra.mxu0 %v1194
        %1680 = vmatprep.subr.mxu0 0.0
        %1681 = vmatpush1.msra.mxu0 %v1195
        %1682 = vmatprep.subr.mxu0 0.0
        %1683 = vmatpush1.msra.mxu0 %v1196
        %1684 = vmatprep.subr.mxu0 0.0
        %1685 = vmatpush1.msra.mxu0 %v1197
        %1686 = vmatprep.subr.mxu0 0.0
        %1687 = vmatpush1.msra.mxu0 %v1198
        %1688 = vmatprep.subr.mxu0 0.0
        %1689 = vmatpush1.msra.mxu0 %v1199
        %1690 = vmatprep.subr.mxu0 0.0
        %1691 = vmatpush1.msra.mxu0 %v1200
        %1692 = vmatprep.subr.mxu0 0.0
        %1693 = vmatpush1.msra.mxu0 %v1201
        %1694 = vmatprep.subr.mxu0 0.0
        %1695 = vmatpush1.msra.mxu0 %v1202
        %1696 = vmatprep.subr.mxu0 0.0
        %1697 = vmatpush1.msra.mxu0 %v1203
        %1698 = vmatprep.subr.mxu0 0.0
        %1699 = vmatpush1.msra.mxu0 %v1204
        %1700 = vmatprep.subr.mxu0 0.0
        %1701 = vmatpush1.msra.mxu0 %v1205
        %1702 = vmatprep.subr.mxu0 0.0
        %1703 = vmatpush1.msra.mxu0 %v1206
        %1704 = vmatprep.subr.mxu0 0.0
        %1705 = vmatpush1.msra.mxu0 %v1207
        %1706 = vmatprep.subr.mxu0 0.0
        %1707 = vmatpush1.msra.mxu0 %v1208
        %1708 = vmatprep.subr.mxu0 0.0
        %1709 = vmatpush1.msra.mxu0 %v1209
        %1710 = vmatprep.subr.mxu0 0.0
        %1711 = vmatpush1.msra.mxu0 %v1210
        %1712 = vmatprep.subr.mxu0 0.0
        %1713 = vmatpush1.msra.mxu0 %v1211
        %1714 = vmatprep.subr.mxu0 0.0
        %1715 = vmatpush1.msra.mxu0 %v1212
        %1716 = vmatprep.mubr.f32.mxu0 %v859
        %1717 = vmatmul.mubr.f32.gmra.mrb[0].mxu0 %v857
        %v1718 = vpop.f32.mrb[0].mxu0
        %v1719 = vadd.f32 %v1644, %v1718
        %v1720 = vpop.f32.mrb[0].mxu0
        %1721 = vmatprep.mubr.f32.mxu0 %v865
        %1722 = vmatmul.mubr.f32.gmra.mrb[0].mxu0 %v863
        %v1723 = vpop.f32.mrb[0].mxu0
        %v1724 = vadd.f32 %v1649, %v1723
        %v1725 = vpop.f32.mrb[0].mxu0
        %1726 = vdwg.mxu0
        %1727 = vmatprep.subr.mxu0 0.0
        %1728 = vmatpush1.msra.mxu0 %v1213
        %1729 = vmatprep.subr.mxu0 0.0
        %1730 = vmatpush1.msra.mxu0 %v1214
        %1731 = vmatprep.subr.mxu0 0.0
        %1732 = vmatpush1.msra.mxu0 %v1215
        %1733 = vmatprep.subr.mxu0 0.0
        %1734 = vmatpush1.msra.mxu0 %v1216
        %1735 = vmatprep.subr.mxu0 0.0
        %1736 = vmatpush1.msra.mxu0 %v1217
        %1737 = vmatprep.subr.mxu0 0.0
        %1738 = vmatpush1.msra.mxu0 %v1218
        %1739 = vmatprep.subr.mxu0 0.0
        %1740 = vmatpush1.msra.mxu0 %v1219
        %1741 = vmatprep.subr.mxu0 0.0
        %1742 = vmatpush1.msra.mxu0 %v1220
        %1743 = vmatprep.subr.mxu0 0.0
        %1744 = vmatpush1.msra.mxu0 %v1221
        %1745 = vmatprep.subr.mxu0 0.0
        %1746 = vmatpush1.msra.mxu0 %v1222
        %1747 = vmatprep.subr.mxu0 0.0
        %1748 = vmatpush1.msra.mxu0 %v1223
        %1749 = vmatprep.subr.mxu0 0.0
        %1750 = vmatpush1.msra.mxu0 %v1224
        %1751 = vmatprep.subr.mxu0 0.0
        %1752 = vmatpush1.msra.mxu0 %v1225
        %1753 = vmatprep.subr.mxu0 0.0
        %1754 = vmatpush1.msra.mxu0 %v1226
        %1755 = vmatprep.subr.mxu0 0.0
        %1756 = vmatpush1.msra.mxu0 %v1227
        %1757 = vmatprep.subr.mxu0 0.0
        %1758 = vmatpush1.msra.mxu0 %v1228
        %1759 = vmatprep.subr.mxu0 0.0
        %1760 = vmatpush1.msra.mxu0 %v1229
        %1761 = vmatprep.subr.mxu0 0.0
        %1762 = vmatpush1.msra.mxu0 %v1230
        %1763 = vmatprep.subr.mxu0 0.0
        %1764 = vmatpush1.msra.mxu0 %v1231
        %1765 = vmatprep.subr.mxu0 0.0
        %1766 = vmatpush1.msra.mxu0 %v1232
        %1767 = vmatprep.subr.mxu0 0.0
        %1768 = vmatpush1.msra.mxu0 %v1233
        %1769 = vmatprep.subr.mxu0 0.0
        %1770 = vmatpush1.msra.mxu0 %v1234
        %1771 = vmatprep.subr.mxu0 0.0
        %1772 = vmatpush1.msra.mxu0 %v1235
        %1773 = vmatprep.subr.mxu0 0.0
        %1774 = vmatpush1.msra.mxu0 %v1236
        %1775 = vmatprep.subr.mxu0 0.0
        %1776 = vmatpush1.msra.mxu0 %v1237
        %1777 = vmatprep.subr.mxu0 0.0
        %1778 = vmatpush1.msra.mxu0 %v1238
        %1779 = vmatprep.subr.mxu0 0.0
        %1780 = vmatpush1.msra.mxu0 %v1239
        %1781 = vmatprep.subr.mxu0 0.0
        %1782 = vmatpush1.msra.mxu0 %v1240
        %1783 = vmatprep.subr.mxu0 0.0
        %1784 = vmatpush1.msra.mxu0 %v1241
        %1785 = vmatprep.subr.mxu0 0.0
        %1786 = vmatpush1.msra.mxu0 %v1242
        %1787 = vmatprep.subr.mxu0 0.0
        %1788 = vmatpush1.msra.mxu0 %v1243
        %1789 = vmatprep.subr.mxu0 0.0
        %1790 = vmatpush1.msra.mxu0 %v1244
        %1791 = vmatprep.mubr.f32.mxu0 %v936
        %1792 = vmatmul.mubr.f32.gmra.mrb[0].mxu0 %v934
        %v1793 = vpop.f32.mrb[0].mxu0
        %v1794 = vadd.f32 %v1719, %v1793
        %v1795 = vpop.f32.mrb[0].mxu0
        %1796 = vmatprep.mubr.f32.mxu0 %v942
        %1797 = vmatmul.mubr.f32.gmra.mrb[0].mxu0 %v940
        %v1798 = vpop.f32.mrb[0].mxu0
        %v1799 = vadd.f32 %v1724, %v1798
        %v1800 = vpop.f32.mrb[0].mxu0
        %1801 = vdwg.mxu0
        %1802 = vmatprep.subr.mxu0 0.0
        %1803 = vmatpush1.msra.mxu0 %v1245
        %1804 = vmatprep.subr.mxu0 0.0
        %1805 = vmatpush1.msra.mxu0 %v1246
        %1806 = vmatprep.subr.mxu0 0.0
        %1807 = vmatpush1.msra.mxu0 %v1247
        %1808 = vmatprep.subr.mxu0 0.0
        %1809 = vmatpush1.msra.mxu0 %v1248
        %1810 = vmatprep.subr.mxu0 0.0
        %1811 = vmatpush1.msra.mxu0 %v1249
        %1812 = vmatprep.subr.mxu0 0.0
        %1813 = vmatpush1.msra.mxu0 %v1250
        %1814 = vmatprep.subr.mxu0 0.0
        %1815 = vmatpush1.msra.mxu0 %v1251
        %1816 = vmatprep.subr.mxu0 0.0
        %1817 = vmatpush1.msra.mxu0 %v1252
        %1818 = vmatprep.subr.mxu0 0.0
        %1819 = vmatpush1.msra.mxu0 %v1253
        %1820 = vmatprep.subr.mxu0 0.0
        %1821 = vmatpush1.msra.mxu0 %v1254
        %1822 = vmatprep.subr.mxu0 0.0
        %1823 = vmatpush1.msra.mxu0 %v1255
        %1824 = vmatprep.subr.mxu0 0.0
        %1825 = vmatpush1.msra.mxu0 %v1256
        %1826 = vmatprep.subr.mxu0 0.0
        %1827 = vmatpush1.msra.mxu0 %v1257
        %1828 = vmatprep.subr.mxu0 0.0
        %1829 = vmatpush1.msra.mxu0 %v1258
        %1830 = vmatprep.subr.mxu0 0.0
        %1831 = vmatpush1.msra.mxu0 %v1259
        %1832 = vmatprep.subr.mxu0 0.0
        %1833 = vmatpush1.msra.mxu0 %v1260
        %1834 = vmatprep.subr.mxu0 0.0
        %1835 = vmatpush1.msra.mxu0 %v1261
        %1836 = vmatprep.subr.mxu0 0.0
        %1837 = vmatpush1.msra.mxu0 %v1262
        %1838 = vmatprep.subr.mxu0 0.0
        %1839 = vmatpush1.msra.mxu0 %v1263
        %1840 = vmatprep.subr.mxu0 0.0
        %1841 = vmatpush1.msra.mxu0 %v1264
        %1842 = vmatprep.subr.mxu0 0.0
        %1843 = vmatpush1.msra.mxu0 %v1265
        %1844 = vmatprep.subr.mxu0 0.0
        %1845 = vmatpush1.msra.mxu0 %v1266
        %1846 = vmatprep.subr.mxu0 0.0
        %1847 = vmatpush1.msra.mxu0 %v1267
        %1848 = vmatprep.subr.mxu0 0.0
        %1849 = vmatpush1.msra.mxu0 %v1268
        %1850 = vmatprep.subr.mxu0 0.0
        %1851 = vmatpush1.msra.mxu0 %v1269
        %1852 = vmatprep.subr.mxu0 0.0
        %1853 = vmatpush1.msra.mxu0 %v1270
        %1854 = vmatprep.subr.mxu0 0.0
        %1855 = vmatpush1.msra.mxu0 %v1271
        %1856 = vmatprep.subr.mxu0 0.0
        %1857 = vmatpush1.msra.mxu0 %v1272
        %1858 = vmatprep.subr.mxu0 0.0
        %1859 = vmatpush1.msra.mxu0 %v1273
        %1860 = vmatprep.subr.mxu0 0.0
        %1861 = vmatpush1.msra.mxu0 %v1274
        %1862 = vmatprep.subr.mxu0 0.0
        %1863 = vmatpush1.msra.mxu0 %v1275
        %1864 = vmatprep.subr.mxu0 0.0
        %1865 = vmatpush1.msra.mxu0 %v1276
        %1866 = vmatprep.mubr.f32.mxu0 %v1013
        %1867 = vmatmul.mubr.f32.gmra.mrb[0].mxu0 %v1011
        %v1868 = vpop.f32.mrb[0].mxu0
        %v1869 = vadd.f32 %v1794, %v1868
        %v1870 = vpop.f32.mrb[0].mxu0
        %1871 = vmatprep.mubr.f32.mxu0 %v1019
        %1872 = vmatmul.mubr.f32.gmra.mrb[0].mxu0 %v1017
        %v1873 = vpop.f32.mrb[0].mxu0
        %v1874 = vadd.f32 %v1799, %v1873
        %v1875 = vpop.f32.mrb[0].mxu0
        %1876 = vdwg.mxu0
        %1877 = vst.msk [vmem:[%s351] sm:$0xff] %vm398, %v1869
        %1878 = vst.msk [vmem:[%s351 + $0x8] sm:$0xff] %vm398, %v1874
        %p1879 = scmp.eq.s32.totalorder %s26, 0
        // Predicated region
        $region57: #{film_forward_pallas.1} parent=51 // pred_check
          %p1880 = pneg %p1879
        $region58: #{film_forward_pallas.1} parent=51 // pred_check_branch
          %1882 = sbr.rel (%p1880) target = $region60
        $region59: #{film_forward_pallas.1} parent=51 // pred_region
          %1883 = vst.msk [vmem:[#allocation2] sm:$0xff] %vm398, 0.0
          %1884 = vst.msk [vmem:[#allocation2 + $0x8] sm:$0xff] %vm398, 0.0
        $region60: #{film_forward_pallas.1} parent=51 // pred_fallthru
          _
        %v1885 = vld [vmem:[#allocation2] sm:$0xff]
        %v1886 = vld [vmem:[#allocation2 + $0x8] sm:$0xff]
        %s1887 = sld [smem:[#allocation4 + %s26]]
        %v1888 = vstv %s1887
        %v1889 = vmul.f32 %v1888, %v1869
        %v1890 = vmul.f32 %v1888, %v1874
        %v1891 = vadd.f32 %v1885, %v1889
        %v1892 = vadd.f32 %v1886, %v1890
        %1893 = vst.msk [vmem:[#allocation2] sm:$0xff] %vm398, %v1891
        %1894 = vst.msk [vmem:[#allocation2 + $0x8] sm:$0xff] %vm398, %v1892
        %p1895 = scmp.eq.s32.totalorder %s26, 2
        // Predicated region
        $region61: #{film_forward_pallas.1} parent=51 // pred_check
          %p1896 = pneg %p1895
        $region62: #{film_forward_pallas.1} parent=51 // pred_check_branch
          %1898 = sbr.rel (%p1896) target = $region64
        $region63: #{film_forward_pallas.1} parent=51 // pred_region
          %v1899 = vld [vmem:[#allocation2] sm:$0xff]
          %v1900 = vld [vmem:[#allocation2 + $0x8] sm:$0xff]
          %s1901 = sld [smem:[#allocation3]]
          %v1902 = vstv %s1901
          %v1903 = vadd.f32 %v1899, %v1902
          %v1904 = vadd.f32 %v1900, %v1902
          %v1905 = vsel %vm398, %v1903, 0.0
          %1906 = vadd.xlane.f32.xlu0 %v1905
          %v1907 = vpop.xlane.xlu0 %1906
          %v1908 = vsel %vm398, %v1904, 0.0
          %1909 = vadd.xlane.f32.xlu0 %v1908
          %v1910 = vpop.xlane.xlu0 %1909
          %v1911 = vrcp.pop 16.0
          %v1912 = vmul.f32 %v1907, %v1911
          %v1913 = vmul.f32 %v1910, %v1911
          %v1914 = vld [vmem:[%s5] sm:$0xff]
          %v1915 = vld [vmem:[%s5 + $0x8] sm:$0xff]
          %v1916 = vmul.f32 %v1912, %v1914
          %v1917 = vmul.f32 %v1913, %v1915
          %v1918 = vld [vmem:[%s6] sm:$0xff]
          %v1919 = vld [vmem:[%s7] sm:$0x1]
          %v1921 = vlaneseq
          %v1922 = vshrl.u32 %v1921, 7
          %v1923 = vsub.s32 0, %v1922
          %v1924 = vrot.slane %v1919, %v1923
          %v1927 = vsel %vm398, %v1918, 0
          %1929 = vmatprep.subr.mxu0 0.0
          %1930 = vmatpush1.msra.mxu0 %v1916
          %1931 = vmatprep.subr.mxu0 0.0
          %1932 = vmatpush1.msra.mxu0 %v1917
          %1933 = vmatprep.subr.mxu0 0.0
          %1934 = vmatpush1.msra.mxu0 0.0
          %1935 = vmatprep.subr.mxu0 0.0
          %1936 = vmatpush1.msra.mxu0 0.0
          %1937 = vmatprep.subr.mxu0 0.0
          %1938 = vmatpush1.msra.mxu0 0.0
          %1939 = vmatprep.subr.mxu0 0.0
          %1940 = vmatpush1.msra.mxu0 0.0
          %1941 = vmatprep.subr.mxu0 0.0
          %1942 = vmatpush1.msra.mxu0 0.0
          %1943 = vmatprep.subr.mxu0 0.0
          %1944 = vmatpush1.msra.mxu0 0.0
          %1945 = vmatprep.subr.mxu0 0.0
          %1946 = vmatpush1.msra.mxu0 0.0
          %1947 = vmatprep.subr.mxu0 0.0
          %1948 = vmatpush1.msra.mxu0 0.0
          %1949 = vmatprep.subr.mxu0 0.0
          %1950 = vmatpush1.msra.mxu0 0.0
          %1951 = vmatprep.subr.mxu0 0.0
          %1952 = vmatpush1.msra.mxu0 0.0
          %1953 = vmatprep.subr.mxu0 0.0
          %1954 = vmatpush1.msra.mxu0 0.0
          %1955 = vmatprep.subr.mxu0 0.0
          %1956 = vmatpush1.msra.mxu0 0.0
          %1957 = vmatprep.subr.mxu0 0.0
          %1958 = vmatpush1.msra.mxu0 0.0
          %1959 = vmatprep.subr.mxu0 0.0
          %1960 = vmatpush1.msra.mxu0 0.0
          %1961 = vmatprep.subr.mxu0 0.0
          %1962 = vmatpush1.msra.mxu0 0.0
          %1963 = vmatprep.subr.mxu0 0.0
          %1964 = vmatpush1.msra.mxu0 0.0
          %1965 = vmatprep.subr.mxu0 0.0
          %1966 = vmatpush1.msra.mxu0 0.0
          %1967 = vmatprep.subr.mxu0 0.0
          %1968 = vmatpush1.msra.mxu0 0.0
          %1969 = vmatprep.subr.mxu0 0.0
          %1970 = vmatpush1.msra.mxu0 0.0
          %1971 = vmatprep.subr.mxu0 0.0
          %1972 = vmatpush1.msra.mxu0 0.0
          %1973 = vmatprep.subr.mxu0 0.0
          %1974 = vmatpush1.msra.mxu0 0.0
          %1975 = vmatprep.subr.mxu0 0.0
          %1976 = vmatpush1.msra.mxu0 0.0
          %1977 = vmatprep.subr.mxu0 0.0
          %1978 = vmatpush1.msra.mxu0 0.0
          %1979 = vmatprep.subr.mxu0 0.0
          %1980 = vmatpush1.msra.mxu0 0.0
          %1981 = vmatprep.subr.mxu0 0.0
          %1982 = vmatpush1.msra.mxu0 0.0
          %1983 = vmatprep.subr.mxu0 0.0
          %1984 = vmatpush1.msra.mxu0 0.0
          %1985 = vmatprep.subr.mxu0 0.0
          %1986 = vmatpush1.msra.mxu0 0.0
          %1987 = vmatprep.subr.mxu0 0.0
          %1988 = vmatpush1.msra.mxu0 0.0
          %1989 = vmatprep.subr.mxu0 0.0
          %1990 = vmatpush1.msra.mxu0 0.0
          %1991 = vmatprep.subr.mxu0 0.0
          %1992 = vmatpush1.msra.mxu0 0.0
          %1993 = vmatprep.mubr.f32.mxu0 0.0
          %1994 = vmatmul.mubr.f32.gmra.mrb[0].mxu0 %v1927
          %v1995 = vpop.f32.mrb[0].mxu0
          %v1996 = vadd.f32 %v1924, %v1995
          %v1997 = vpop.f32.mrb[0].mxu0
          %1998 = vdwg.mxu0
          %1999 = vst [vmem:[%s9] sm:$0xff] %v1996
        $region64: #{film_forward_pallas.1} parent=51 // pred_fallthru
          _
        %s2000 = sand.u32 %s212, 1
        %s2001 = scalar_lea.sflag [#allocation5], %s2000
        %s2002 = sand.u32 %s212, 1
        %s2003 = smul.addr %s2002, 16
        %s2004 = scalar_lea.vmem [#allocation7], %s2003
        // Predicated region
        $region65: #{film_forward_pallas.1} parent=51 // pred_check
          %p2005 = pneg %p222
        $region66: #{film_forward_pallas.1} parent=51 // pred_check_branch
          %2007 = sbr.rel (%p2005) target = $region68
        $region67: #{film_forward_pallas.1} parent=51 // pred_region
          %s2009 = ssub.s32 256, 256
          %2010 = vsyncadd %s2001, %s2009
          %s2011 = smul.addr %s26, 2
          %s2012 = smul.addr %s2011, 128
          %s2013 = scalar_lea.hbm %s8, %s2012
          %s2014 = sshll.u32 %s2004, 4
          %s2015 = int_to_ptr.vmem [resolvable:$true] %s2014
          %2020 = dma.vmem_to_hbm [thread:$0]  %s2015, 256, %s2013, %s2001, 128, 128, 8
        $region68: #{film_forward_pallas.1} parent=51 // pred_fallthru
          _
        // Predicated region
        $region69: #{film_forward_pallas.1} parent=51 // pred_check
          %p2021 = pneg %p243
        $region70: #{film_forward_pallas.1} parent=51 // pred_check_branch
          %2023 = sbr.rel (%p2021) target = $region72
        $region71: #{film_forward_pallas.1} parent=51 // pred_region
          _
        $region72: #{film_forward_pallas.1} parent=51 // pred_fallthru
          _
        // Predicated region
        $region73: #{film_forward_pallas.1} parent=51 // pred_check
          %p2024 = pneg %p243
        $region74: #{film_forward_pallas.1} parent=51 // pred_check_branch
          %2026 = sbr.rel (%p2024) target = $region76
        $region75: #{film_forward_pallas.1} parent=51 // pred_region
          _
        $region76: #{film_forward_pallas.1} parent=51 // pred_fallthru
          _
      $region52: #{film_forward_pallas.1} parent=5 // pred_fallthru
        _
      %p2027 = scmp.le.s32.totalorder 2, %s21
      // Predicated region
      $region77: #{film_forward_pallas.1} parent=5 // pred_check
        %p2028 = pneg %p2027
      $region78: #{film_forward_pallas.1} parent=5 // pred_check_branch
        %2030 = sbr.rel (%p2028) target = $region80
      $region79: #{film_forward_pallas.1} parent=5 // pred_region
        %s2031 = ssub.s32 %s21, 2
        // Predicated region
        $region81: #{film_forward_pallas.1} parent=79 // pred_check
          %p2032 = pneg %p228
        $region82: #{film_forward_pallas.1} parent=79 // pred_check_branch
          %2034 = sbr.rel (%p2032) target = $region84
        $region83: #{film_forward_pallas.1} parent=79 // pred_region
          %s2035 = sand.u32 %s213, 1
          %s2036 = scalar_lea.sflag [#allocation5], %s2035
          %s2037 = sand.u32 %s213, 1
          %s2038 = smul.addr %s2037, 16
          %s2039 = scalar_lea.vmem [#allocation7], %s2038
          %2040 = dma.done %s2036, 256
        $region84: #{film_forward_pallas.1} parent=79 // pred_fallthru
          _
      $region80: #{film_forward_pallas.1} parent=5 // pred_fallthru
        _
    $region6: #{film_forward_pallas.1} parent=1 // loop_footer
      %s25 = sadd.s32 1, %s21
    $region7: #{film_forward_pallas.1} parent=1 // loop_footer_branch
      %20 = sbr.rel target = $region3
    $region8: #{film_forward_pallas.1} parent=1 // loop_exit
      _
    %2041 = vsyncpa [#allocation5], 1
    %s2042 = scalar_lea.sflag [#allocation5], 1
    %2043 = vsyncpa %s2042, 1
    %2044 = vsyncpa [#allocation6], 1
    %s2045 = scalar_lea.sflag [#allocation6], 1
    %2046 = vsyncpa %s2045, 1

</llo_original>
